<compile_context>
chip_gen: v7x
topology: tpu7x:2x2x1
jax: 0.10.0
libtpu: 0.0.40
codegen_flags: <defaults>
</compile_context>

<pallas_src>
import jax
import jax.numpy as jnp
from jax.experimental import pallas as pl
from jax.experimental.pallas import tpu as pltpu

KSIZE = 7
PAD = (KSIZE - 1) // 2  # 3


def _round_up(v, m):
    return ((v + m - 1) // m) * m


def _vmem_capacity_bytes():
    """Physical per-core VMEM; conservative fallback if the query fails."""
    try:
        info = pltpu.get_tpu_info()
        cap = getattr(info, "vmem_capacity_bytes", None)
        if cap:
            return int(cap)
    except Exception:
        pass
    return 64 << 20  # v7x per-TC size: safe lower bound for all generations


def _pick_c_tile(c, hw, itemsize, sub, max_tile_bytes):
    """Channel tile for the gating sweep: multiple of `sub` (or full C)."""
    if c % sub != 0:
        return c
    tile = c
    # Halve only while the result remains a legal sublane multiple.
    while tile % (2 * sub) == 0 and tile * hw * itemsize > max_tile_bytes:
        tile //= 2
    return tile


def spatial_gate(x, conv_w, bn_gamma, bn_beta, bn_mean, bn_var, eps=1e-5):
    """x: (N, C, H, W).  conv_w: (1, 2, 7, 7)."""
    N, C, H, W = x.shape
    HW = H * W
    itemsize = jnp.dtype(x.dtype).itemsize
    sub = 16 if itemsize == 2 else 8  # sublane multiple for the C-tile

    # Lane-dense flat layout for the HBM-bound streaming part (free reshape).
    x_flat = x.reshape(N, C, HW)

    # Flat padded-scratch geometry: pooled row lives at a 128-aligned lane
    # offset WOFF; PAD rows of zeros fit before/after it inside the scratch.
    WOFF = _round_up(PAD * W + PAD, 128)
    LP = _round_up(WOFF + HW + PAD * W + PAD, 128)

    # ---- per-core VMEM budgeting --------------------------------------------
    budget = int(_vmem_capacity_bytes() * 0.85)
    slab_bytes = C * HW * itemsize
    # Double-buffer the x slab only if it fits comfortably; otherwise accept an
    # exposed full-slab DMA per batch element (single buffering).
    x_bufs = 2 if 2 * slab_bytes <= int(0.7 * budget) else 1

    scratch_bytes = (2 * LP + HW) * 4 + 8 * 128 * 4  # pad + gate + weight slab
    avail_out = budget - x_bufs * slab_bytes - scratch_bytes
    max_tile_bytes = max(min(8 << 20, avail_out // 2), 1 << 20)
    TC = _pick_c_tile(C, HW, itemsize, sub, max_tile_bytes)
    NUM_CT = C // TC

    # Split the channel-tile sweep so both v7x TensorCores are busy even when
    # N == 1.  The gate is rebuilt at the first inner tile of every (n, split),
    # so each core is self-contained.  Harmless (sequential) on 1-TC chips.
    CSPLIT = 2 if (NUM_CT % 2 == 0 and NUM_CT >= 2) else 1
    CT_PER = NUM_CT // CSPLIT

    # Pooling strategy: full-slab reduce only when the slab is small; otherwise
    # a chunked fori_loop (bounds the live range / avoids a vreg spill storm).
    FULL_SLAB_POOL = (slab_bytes <= (256 << 10)) or C < 8
    if not FULL_SLAB_POOL:
        CCHUNK = 32 if C >= 32 else (16 if C >= 16 else 8)
        NCHUNK = C // CCHUNK
        CREM = C % CCHUNK
        UNROLL = NCHUNK if NCHUNK <= 8 else 2
    else:
        CCHUNK = NCHUNK = CREM = UNROLL = 0

    # Fold BN running stats into scale/shift (glue, not hot path).
    bn_scale = bn_gamma / jnp.sqrt(bn_var + eps)
    bn_shift = bn_beta - bn_mean * bn_scale
    bn_params = jnp.stack([bn_scale[0], bn_shift[0]]).astype(jnp.float32)
    # (2, 49) weight slab: [c, ky*7 + kx], whole-array resident in VMEM.
    w_vmem = conv_w.reshape(2, KSIZE * KSIZE).astype(jnp.float32)

    def kernel(w_ref, bn_ref, x_ref, o_ref, pad_ref, gate_ref):
        # w_ref   : VMEM (2, 49)      conv weights, [c, ky*7+kx]
        # bn_ref  : SMEM (2,)         [scale, shift]
        # x_ref   : VMEM (1, C, HW)   full slab, resident across cs/ct
        # o_ref   : VMEM (1, TC, HW)  current channel tile of the output
        # pad_ref : VMEM (2, LP)      zero-bordered flat pooled maps (max, mean)
        # gate_ref: VMEM (1, HW)      sigmoid gate, built at ct == 0
        cs = pl.program_id(1)
        ct = pl.program_id(2)

        @pl.when(ct == 0)
        def _build_gate():
            # ---- channel pooling (max & mean over C), lane-dense (1, HW) ----
            if FULL_SLAB_POOL:
                xall = x_ref[0].astype(jnp.float32)            # (C, HW)
                mx = jnp.max(xall, axis=0, keepdims=True)
                sm = jnp.sum(xall, axis=0, keepdims=True)
            else:
                def pool_body(i, carry):
                    m, s = carry
                    c0 = pl.multiple_of(i * CCHUNK, CCHUNK)
                    blk = x_ref[0, pl.ds(c0, CCHUNK), :].astype(jnp.float32)
                    return (jnp.maximum(m, jnp.max(blk, axis=0, keepdims=True)),
                            s + jnp.sum(blk, axis=0, keepdims=True))
                mx, sm = jax.lax.fori_loop(
                    0, NCHUNK, pool_body,
                    (jnp.full((1, HW), -jnp.inf, jnp.float32),
                     jnp.zeros((1, HW), jnp.float32)),
                    unroll=UNROLL)
                if CREM:
                    blk = x_ref[0, NCHUNK * CCHUNK:C, :].astype(jnp.float32)
                    mx = jnp.maximum(mx, jnp.max(blk, axis=0, keepdims=True))
                    sm = sm + jnp.sum(blk, axis=0, keepdims=True)
            mn = sm * (1.0 / C)

            # ---- zero only the halo borders; interior is fully overwritten --
            pad_ref[:, 0:WOFF] = jnp.zeros((2, WOFF), jnp.float32)
            pad_ref[:, WOFF + HW:LP] = jnp.zeros((2, LP - WOFF - HW),
                                                 jnp.float32)
            pad_ref[0:1, WOFF:WOFF + HW] = mx
            pad_ref[1:2, WOFF:WOFF + HW] = mn

            # ---- 7x7 conv (2 -> 1 ch) directly in flat layout.  49 folded
            #      two-channel taps, one sublane reduce at the end.  Vertical
            #      padding comes from the zeroed border; horizontal validity
            #      is one precomputed mask per kx. ----------------------------
            col = jax.lax.broadcasted_iota(jnp.int32, (1, HW), 1) % W
            acc2 = jnp.zeros((2, HW), jnp.float32)
            for kx in range(KSIZE):
                part = jnp.zeros((2, HW), jnp.float32)
                for ky in range(KSIZE):
                    k = ky * KSIZE + kx
                    start = WOFF + (ky - PAD) * W + (kx - PAD)
                    part = part + w_ref[:, k:k + 1] * pad_ref[:, start:start + HW]
                off = kx - PAD
                valid = jnp.logical_and(col + off >= 0, col + off < W)
                acc2 = acc2 + jnp.where(valid, part, 0.0)
            y = jnp.sum(acc2, axis=0, keepdims=True)           # (1, HW)

            # BN affine + sigmoid (exp + reciprocal -> EUP-friendly epilogue).
            y = y * bn_ref[0] + bn_ref[1]
            gate_ref[...] = pl.reciprocal(1.0 + jnp.exp(-y), approx=False)

        # ---- gating sweep: lane-dense multiply of one channel tile ----------
        gct = cs * CT_PER + ct
        c0 = pl.multiple_of(gct * TC, TC)
        xs = x_ref[0, pl.ds(c0, TC), :]                        # (TC, HW)
        o_ref[0] = (xs * gate_ref[...]).astype(o_ref.dtype)

    # VMEM request: actual buffering need (slab buffers + double-buffered
    # output tile + scratch) with headroom, clamped to the physical budget.
    need = x_bufs * slab_bytes + 2 * TC * HW * itemsize + scratch_bytes
    vmem_limit = int(min(budget, max(need + (4 << 20), 32 << 20)))

    x_spec_kwargs = {}
    if x_bufs == 1:
        x_spec_kwargs["pipeline_mode"] = pl.Buffered(1)

    out_flat = pl.pallas_call(
        kernel,
        out_shape=jax.ShapeDtypeStruct((N, C, HW), x.dtype),
        grid_spec=pltpu.PrefetchScalarGridSpec(
            num_scalar_prefetch=0,
            grid=(N, CSPLIT, CT_PER),
            in_specs=[
                pl.BlockSpec(memory_space=pltpu.MemorySpace.VMEM),   # conv w
                pl.BlockSpec(memory_space=pltpu.MemorySpace.SMEM),   # bn params
                pl.BlockSpec((1, C, HW), lambda n, cs, ct: (n, 0, 0),
                             **x_spec_kwargs),                       # x slab
            ],
            out_specs=pl.BlockSpec(
                (1, TC, HW), lambda n, cs, ct: (n, cs * CT_PER + ct, 0)),
            scratch_shapes=[
                pltpu.VMEM((2, LP), jnp.float32),    # padded pooled maps
                pltpu.VMEM((1, HW), jnp.float32),    # cached gate
            ],
        ),
        compiler_params=pltpu.CompilerParams(
            dimension_semantics=("parallel", "parallel", "arbitrary"),
            vmem_limit_bytes=vmem_limit,
        ),
    )(w_vmem, bn_params, x_flat)

    return out_flat.reshape(N, C, H, W)


def spatial_gate_reference(x, conv_w, bn_gamma, bn_beta, bn_mean, bn_var,
                           eps=1e-5):
    mx = jnp.max(x, axis=1, keepdims=True)
    mn = jnp.mean(x, axis=1, keepdims=True)
    pooled = jnp.concatenate([mx, mn], axis=1)
    y = jax.lax.conv_general_dilated(
        pooled, conv_w, window_strides=(1, 1),
        padding=[(PAD, PAD), (PAD, PAD)],
        dimension_numbers=("NCHW", "OIHW", "NCHW"))
    scale = bn_gamma / jnp.sqrt(bn_var + eps)
    shift = bn_beta - bn_mean * scale
    y = y * scale[None, :, None, None] + shift[None, :, None, None]
    return x * jax.nn.sigmoid(y)


if __name__ == "__main__":
    key = jax.random.PRNGKey(0)
    k_x, k_w = jax.random.split(key)

    N, C, H, W = 2, 4, 16, 16
    x = jax.random.normal(k_x, (N, C, H, W), dtype=jnp.float32)

    # Deterministic synthetic parameters (no checkpoint load).
    conv_w = 0.1 * jax.random.normal(k_w, (1, 2, KSIZE, KSIZE),
                                     dtype=jnp.float32)
    bn_gamma = jnp.full((1,), 1.3, jnp.float32)
    bn_beta = jnp.full((1,), 0.2, jnp.float32)
    bn_mean = jnp.full((1,), 0.1, jnp.float32)
    bn_var = jnp.full((1,), 0.9, jnp.float32)

    out = spatial_gate(x, conv_w, bn_gamma, bn_beta, bn_mean, bn_var)
    out = jax.block_until_ready(out)

    ref = spatial_gate_reference(x, conv_w, bn_gamma, bn_beta, bn_mean, bn_var)
    assert out.shape == (N, C, H, W)
    # f32 accumulation-order tolerance vs. XLA's conv + jax.nn.sigmoid path.
    assert jnp.allclose(out, ref, atol=1e-4, rtol=1e-4), (
        float(jnp.max(jnp.abs(out - ref))))

    print("KERNEL_OK")
</pallas_src>

<mosaic_0001>
module attributes {stable_mosaic.version = 11 : i64} {
  func.func @kernel(%arg0: i32, %arg1: i32, %arg2: i32, %arg3: memref<2x49xf32, #tpu.memory_space<vmem>>, %arg4: memref<2xf32, #tpu.memory_space<smem>>, %arg5: memref<1x4x256xf32, #tpu.memory_space<vmem>>, %arg6: memref<1x4x256xf32, #tpu.memory_space<vmem>>, %arg7: memref<2x512xf32, #tpu.memory_space<vmem>>, %arg8: memref<1x256xf32, #tpu.memory_space<vmem>>) attributes {dimension_semantics = [#tpu.dimension_semantics<parallel>, #tpu.dimension_semantics<parallel>, #tpu.dimension_semantics<arbitrary>], iteration_bounds = array<i64: 2, 1, 1>, scalar_prefetch = 0 : i64, scratch_operands = 2 : i64, tpu.core_type = #tpu.core_type<tc>, window_params = [{pipeline_mode = #tpu.pipeline_mode<synchronous>, transform_indices = @transform_0, window_bounds = array<i64: 2, 49>}, {transform_indices = @transform_1, window_bounds = array<i64: 2>}, {transform_indices = @transform_2, window_bounds = array<i64: 1, 4, 256>}, {transform_indices = @transform_3, window_bounds = array<i64: 1, 4, 256>}]} {
    %c0_i32 = arith.constant 0 : i32
    %0 = arith.cmpi eq, %arg2, %c0_i32 : i32
    %1 = arith.extui %0 : i1 to i32
    %c0_i32_0 = arith.constant 0 : i32
    %2 = arith.cmpi ne, %1, %c0_i32_0 : i32
    scf.if %2 {
      %c0_7 = arith.constant 0 : index
      %c0_8 = arith.constant 0 : index
      %c0_9 = arith.constant 0 : index
      %16 = vector.load %arg5[%c0_7, %c0_8, %c0_9] : memref<1x4x256xf32, #tpu.memory_space<vmem>>, vector<1x4x256xf32>
      %17 = vector.shape_cast %16 : vector<1x4x256xf32> to vector<4x256xf32>
      %cst = arith.constant dense<0xFF800000> : vector<256xf32>
      %18 = vector.multi_reduction <maximumf>, %17, %cst [0] : vector<4x256xf32> to vector<256xf32>
      %19 = vector.shape_cast %18 : vector<256xf32> to vector<1x256xf32>
      %cst_10 = arith.constant dense<0.000000e+00> : vector<256xf32>
      %20 = vector.multi_reduction <add>, %17, %cst_10 [0] : vector<4x256xf32> to vector<256xf32>
      %21 = vector.shape_cast %20 : vector<256xf32> to vector<1x256xf32>
      %cst_11 = arith.constant 2.500000e-01 : f32
      %22 = vector.broadcast %cst_11 : f32 to vector<1x256xf32>
      %23 = arith.mulf %21, %22 : vector<1x256xf32>
      %cst_12 = arith.constant 0.000000e+00 : f32
      %24 = vector.broadcast %cst_12 : f32 to vector<2x128xf32>
      %c0_13 = arith.constant 0 : index
      %c0_14 = arith.constant 0 : index
      %25 = vector.load %arg7[%c0_13, %c0_14] : memref<2x512xf32, #tpu.memory_space<vmem>>, vector<2x128xf32>
      tpu.vector_store %arg7[%c0_13, %c0_14], %24 {strides = array<i32>} : memref<2x512xf32, #tpu.memory_space<vmem>>, vector<2x128xf32>,
      %cst_15 = arith.constant 0.000000e+00 : f32
      %26 = vector.broadcast %cst_15 : f32 to vector<2x128xf32>
      %c0_16 = arith.constant 0 : index
      %c384 = arith.constant 384 : index
      %27 = vector.load %arg7[%c0_16, %c384] : memref<2x512xf32, #tpu.memory_space<vmem>>, vector<2x128xf32>
      tpu.vector_store %arg7[%c0_16, %c384], %26 {strides = array<i32>} : memref<2x512xf32, #tpu.memory_space<vmem>>, vector<2x128xf32>,
      %c0_17 = arith.constant 0 : index
      %c128 = arith.constant 128 : index
      %28 = vector.load %arg7[%c0_17, %c128] : memref<2x512xf32, #tpu.memory_space<vmem>>, vector<1x256xf32>
      tpu.vector_store %arg7[%c0_17, %c128], %19 {strides = array<i32>} : memref<2x512xf32, #tpu.memory_space<vmem>>, vector<1x256xf32>,
      %c1 = arith.constant 1 : index
      %c128_18 = arith.constant 128 : index
      %29 = vector.load %arg7[%c1, %c128_18] : memref<2x512xf32, #tpu.memory_space<vmem>>, vector<1x256xf32>
      tpu.vector_store %arg7[%c1, %c128_18], %23 {strides = array<i32>} : memref<2x512xf32, #tpu.memory_space<vmem>>, vector<1x256xf32>,
      %30 = tpu.iota {dimensions = array<i32: 1>} : vector<1x256xi32>
      %c16_i32 = arith.constant 16 : i32
      %c0_i32_19 = arith.constant 0 : i32
      %31 = arith.cmpi eq, %c16_i32, %c0_i32_19 : i32
      %c1_i32_20 = arith.constant 1 : i32
      %32 = arith.select %31, %c1_i32_20, %c16_i32 : i32
      %33 = vector.broadcast %32 : i32 to vector<1x256xi32>
      %34 = arith.remsi %30, %33 : vector<1x256xi32>
      %c0_i32_21 = arith.constant 0 : i32
      %35 = vector.broadcast %c0_i32_21 : i32 to vector<1x256xi32>
      %36 = arith.cmpi ne, %34, %35 : vector<1x256xi32>
      %c0_i32_22 = arith.constant 0 : i32
      %37 = vector.broadcast %c0_i32_22 : i32 to vector<1x256xi32>
      %38 = arith.cmpi slt, %34, %37 : vector<1x256xi32>
      %c0_i32_23 = arith.constant 0 : i32
      %39 = arith.cmpi slt, %32, %c0_i32_23 : i32
      %40 = vector.broadcast %39 : i1 to vector<1x256xi1>
      %41 = vector.broadcast %40 : vector<1x256xi1> to vector<1x256xi1>
      %42 = arith.xori %38, %41 : vector<1x256xi1>
      %43 = arith.andi %42, %36 : vector<1x256xi1>
      %44 = vector.broadcast %32 : i32 to vector<1x256xi32>
      %45 = arith.addi %34, %44 : vector<1x256xi32>
      %46 = arith.select %43, %45, %34 : vector<1x256xi1>, vector<1x256xi32>
      %cst_24 = arith.constant 0.000000e+00 : f32
      %47 = vector.broadcast %cst_24 : f32 to vector<2x256xf32>
      %cst_25 = arith.constant 0.000000e+00 : f32
      %48 = vector.broadcast %cst_25 : f32 to vector<2x256xf32>
      %c0_26 = arith.constant 0 : index
      %c0_27 = arith.constant 0 : index
      %49 = vector.load %arg3[%c0_26, %c0_27] : memref<2x49xf32, #tpu.memory_space<vmem>>, vector<2x1xf32>
      %c0_28 = arith.constant 0 : index
      %c77 = arith.constant 77 : index
      %50 = vector.load %arg7[%c0_28, %c77] : memref<2x512xf32, #tpu.memory_space<vmem>>, vector<2x256xf32>
      %51 = vector.broadcast %49 : vector<2x1xf32> to vector<2x256xf32>
      %52 = arith.mulf %51, %50 : vector<2x256xf32>
      %53 = arith.addf %48, %52 : vector<2x256xf32>
      %c0_29 = arith.constant 0 : index
      %c7 = arith.constant 7 : index
      %54 = vector.load %arg3[%c0_29, %c7] : memref<2x49xf32, #tpu.memory_space<vmem>>, vector<2x1xf32>
      %c0_30 = arith.constant 0 : index
      %c93 = arith.constant 93 : index
      %55 = vector.load %arg7[%c0_30, %c93] : memref<2x512xf32, #tpu.memory_space<vmem>>, vector<2x256xf32>
      %56 = vector.broadcast %54 : vector<2x1xf32> to vector<2x256xf32>
      %57 = arith.mulf %56, %55 : vector<2x256xf32>
      %58 = arith.addf %53, %57 : vector<2x256xf32>
      %c0_31 = arith.constant 0 : index
      %c14 = arith.constant 14 : index
      %59 = vector.load %arg3[%c0_31, %c14] : memref<2x49xf32, #tpu.memory_space<vmem>>, vector<2x1xf32>
      %c0_32 = arith.constant 0 : index
      %c109 = arith.constant 109 : index
      %60 = vector.load %arg7[%c0_32, %c109] : memref<2x512xf32, #tpu.memory_space<vmem>>, vector<2x256xf32>
      %61 = vector.broadcast %59 : vector<2x1xf32> to vector<2x256xf32>
      %62 = arith.mulf %61, %60 : vector<2x256xf32>
      %63 = arith.addf %58, %62 : vector<2x256xf32>
      %c0_33 = arith.constant 0 : index
      %c21 = arith.constant 21 : index
      %64 = vector.load %arg3[%c0_33, %c21] : memref<2x49xf32, #tpu.memory_space<vmem>>, vector<2x1xf32>
      %c0_34 = arith.constant 0 : index
      %c125 = arith.constant 125 : index
      %65 = vector.load %arg7[%c0_34, %c125] : memref<2x512xf32, #tpu.memory_space<vmem>>, vector<2x256xf32>
      %66 = vector.broadcast %64 : vector<2x1xf32> to vector<2x256xf32>
      %67 = arith.mulf %66, %65 : vector<2x256xf32>
      %68 = arith.addf %63, %67 : vector<2x256xf32>
      %c0_35 = arith.constant 0 : index
      %c28 = arith.constant 28 : index
      %69 = vector.load %arg3[%c0_35, %c28] : memref<2x49xf32, #tpu.memory_space<vmem>>, vector<2x1xf32>
      %c0_36 = arith.constant 0 : index
      %c141 = arith.constant 141 : index
      %70 = vector.load %arg7[%c0_36, %c141] : memref<2x512xf32, #tpu.memory_space<vmem>>, vector<2x256xf32>
      %71 = vector.broadcast %69 : vector<2x1xf32> to vector<2x256xf32>
      %72 = arith.mulf %71, %70 : vector<2x256xf32>
      %73 = arith.addf %68, %72 : vector<2x256xf32>
      %c0_37 = arith.constant 0 : index
      %c35 = arith.constant 35 : index
      %74 = vector.load %arg3[%c0_37, %c35] : memref<2x49xf32, #tpu.memory_space<vmem>>, vector<2x1xf32>
      %c0_38 = arith.constant 0 : index
      %c157 = arith.constant 157 : index
      %75 = vector.load %arg7[%c0_38, %c157] : memref<2x512xf32, #tpu.memory_space<vmem>>, vector<2x256xf32>
      %76 = vector.broadcast %74 : vector<2x1xf32> to vector<2x256xf32>
      %77 = arith.mulf %76, %75 : vector<2x256xf32>
      %78 = arith.addf %73, %77 : vector<2x256xf32>
      %c0_39 = arith.constant 0 : index
      %c42 = arith.constant 42 : index
      %79 = vector.load %arg3[%c0_39, %c42] : memref<2x49xf32, #tpu.memory_space<vmem>>, vector<2x1xf32>
      %c0_40 = arith.constant 0 : index
      %c173 = arith.constant 173 : index
      %80 = vector.load %arg7[%c0_40, %c173] : memref<2x512xf32, #tpu.memory_space<vmem>>, vector<2x256xf32>
      %81 = vector.broadcast %79 : vector<2x1xf32> to vector<2x256xf32>
      %82 = arith.mulf %81, %80 : vector<2x256xf32>
      %83 = arith.addf %78, %82 : vector<2x256xf32>
      %c-3_i32 = arith.constant -3 : i32
      %84 = vector.broadcast %c-3_i32 : i32 to vector<1x256xi32>
      %85 = arith.addi %46, %84 : vector<1x256xi32>
      %c0_i32_41 = arith.constant 0 : i32
      %86 = vector.broadcast %c0_i32_41 : i32 to vector<1x256xi32>
      %87 = arith.cmpi sge, %85, %86 : vector<1x256xi32>
      %c-3_i32_42 = arith.constant -3 : i32
      %88 = vector.broadcast %c-3_i32_42 : i32 to vector<1x256xi32>
      %89 = arith.addi %46, %88 : vector<1x256xi32>
      %c16_i32_43 = arith.constant 16 : i32
      %90 = vector.broadcast %c16_i32_43 : i32 to vector<1x256xi32>
      %91 = arith.cmpi slt, %89, %90 : vector<1x256xi32>
      %92 = arith.andi %87, %91 : vector<1x256xi1>
      %cst_44 = arith.constant 0.000000e+00 : f32
      %93 = vector.shape_cast %92 : vector<1x256xi1> to vector<1x256xi1>
      %94 = vector.broadcast %93 : vector<1x256xi1> to vector<2x256xi1>
      %95 = vector.broadcast %cst_44 : f32 to vector<2x256xf32>
      %96 = arith.select %94, %83, %95 : vector<2x256xi1>, vector<2x256xf32>
      %97 = arith.addf %47, %96 : vector<2x256xf32>
      %cst_45 = arith.constant 0.000000e+00 : f32
      %98 = vector.broadcast %cst_45 : f32 to vector<2x256xf32>
      %c0_46 = arith.constant 0 : index
      %c1_47 = arith.constant 1 : index
      %99 = vector.load %arg3[%c0_46, %c1_47] : memref<2x49xf32, #tpu.memory_space<vmem>>, vector<2x1xf32>
      %c0_48 = arith.constant 0 : index
      %c78 = arith.constant 78 : index
      %100 = vector.load %arg7[%c0_48, %c78] : memref<2x512xf32, #tpu.memory_space<vmem>>, vector<2x256xf32>
      %101 = vector.broadcast %99 : vector<2x1xf32> to vector<2x256xf32>
      %102 = arith.mulf %101, %100 : vector<2x256xf32>
      %103 = arith.addf %98, %102 : vector<2x256xf32>
      %c0_49 = arith.constant 0 : index
      %c8 = arith.constant 8 : index
      %104 = vector.load %arg3[%c0_49, %c8] : memref<2x49xf32, #tpu.memory_space<vmem>>, vector<2x1xf32>
      %c0_50 = arith.constant 0 : index
      %c94 = arith.constant 94 : index
      %105 = vector.load %arg7[%c0_50, %c94] : memref<2x512xf32, #tpu.memory_space<vmem>>, vector<2x256xf32>
      %106 = vector.broadcast %104 : vector<2x1xf32> to vector<2x256xf32>
      %107 = arith.mulf %106, %105 : vector<2x256xf32>
      %108 = arith.addf %103, %107 : vector<2x256xf32>
      %c0_51 = arith.constant 0 : index
      %c15 = arith.constant 15 : index
      %109 = vector.load %arg3[%c0_51, %c15] : memref<2x49xf32, #tpu.memory_space<vmem>>, vector<2x1xf32>
      %c0_52 = arith.constant 0 : index
      %c110 = arith.constant 110 : index
      %110 = vector.load %arg7[%c0_52, %c110] : memref<2x512xf32, #tpu.memory_space<vmem>>, vector<2x256xf32>
      %111 = vector.broadcast %109 : vector<2x1xf32> to vector<2x256xf32>
      %112 = arith.mulf %111, %110 : vector<2x256xf32>
      %113 = arith.addf %108, %112 : vector<2x256xf32>
      %c0_53 = arith.constant 0 : index
      %c22 = arith.constant 22 : index
      %114 = vector.load %arg3[%c0_53, %c22] : memref<2x49xf32, #tpu.memory_space<vmem>>, vector<2x1xf32>
      %c0_54 = arith.constant 0 : index
      %c126 = arith.constant 126 : index
      %115 = vector.load %arg7[%c0_54, %c126] : memref<2x512xf32, #tpu.memory_space<vmem>>, vector<2x256xf32>
      %116 = vector.broadcast %114 : vector<2x1xf32> to vector<2x256xf32>
      %117 = arith.mulf %116, %115 : vector<2x256xf32>
      %118 = arith.addf %113, %117 : vector<2x256xf32>
      %c0_55 = arith.constant 0 : index
      %c29 = arith.constant 29 : index
      %119 = vector.load %arg3[%c0_55, %c29] : memref<2x49xf32, #tpu.memory_space<vmem>>, vector<2x1xf32>
      %c0_56 = arith.constant 0 : index
      %c142 = arith.constant 142 : index
      %120 = vector.load %arg7[%c0_56, %c142] : memref<2x512xf32, #tpu.memory_space<vmem>>, vector<2x256xf32>
      %121 = vector.broadcast %119 : vector<2x1xf32> to vector<2x256xf32>
      %122 = arith.mulf %121, %120 : vector<2x256xf32>
      %123 = arith.addf %118, %122 : vector<2x256xf32>
      %c0_57 = arith.constant 0 : index
      %c36 = arith.constant 36 : index
      %124 = vector.load %arg3[%c0_57, %c36] : memref<2x49xf32, #tpu.memory_space<vmem>>, vector<2x1xf32>
      %c0_58 = arith.constant 0 : index
      %c158 = arith.constant 158 : index
      %125 = vector.load %arg7[%c0_58, %c158] : memref<2x512xf32, #tpu.memory_space<vmem>>, vector<2x256xf32>
      %126 = vector.broadcast %124 : vector<2x1xf32> to vector<2x256xf32>
      %127 = arith.mulf %126, %125 : vector<2x256xf32>
      %128 = arith.addf %123, %127 : vector<2x256xf32>
      %c0_59 = arith.constant 0 : index
      %c43 = arith.constant 43 : index
      %129 = vector.load %arg3[%c0_59, %c43] : memref<2x49xf32, #tpu.memory_space<vmem>>, vector<2x1xf32>
      %c0_60 = arith.constant 0 : index
      %c174 = arith.constant 174 : index
      %130 = vector.load %arg7[%c0_60, %c174] : memref<2x512xf32, #tpu.memory_space<vmem>>, vector<2x256xf32>
      %131 = vector.broadcast %129 : vector<2x1xf32> to vector<2x256xf32>
      %132 = arith.mulf %131, %130 : vector<2x256xf32>
      %133 = arith.addf %128, %132 : vector<2x256xf32>
      %c-2_i32 = arith.constant -2 : i32
      %134 = vector.broadcast %c-2_i32 : i32 to vector<1x256xi32>
      %135 = arith.addi %46, %134 : vector<1x256xi32>
      %c0_i32_61 = arith.constant 0 : i32
      %136 = vector.broadcast %c0_i32_61 : i32 to vector<1x256xi32>
      %137 = arith.cmpi sge, %135, %136 : vector<1x256xi32>
      %c-2_i32_62 = arith.constant -2 : i32
      %138 = vector.broadcast %c-2_i32_62 : i32 to vector<1x256xi32>
      %139 = arith.addi %46, %138 : vector<1x256xi32>
      %c16_i32_63 = arith.constant 16 : i32
      %140 = vector.broadcast %c16_i32_63 : i32 to vector<1x256xi32>
      %141 = arith.cmpi slt, %139, %140 : vector<1x256xi32>
      %142 = arith.andi %137, %141 : vector<1x256xi1>
      %cst_64 = arith.constant 0.000000e+00 : f32
      %143 = vector.shape_cast %142 : vector<1x256xi1> to vector<1x256xi1>
      %144 = vector.broadcast %143 : vector<1x256xi1> to vector<2x256xi1>
      %145 = vector.broadcast %cst_64 : f32 to vector<2x256xf32>
      %146 = arith.select %144, %133, %145 : vector<2x256xi1>, vector<2x256xf32>
      %147 = arith.addf %97, %146 : vector<2x256xf32>
      %cst_65 = arith.constant 0.000000e+00 : f32
      %148 = vector.broadcast %cst_65 : f32 to vector<2x256xf32>
      %c0_66 = arith.constant 0 : index
      %c2 = arith.constant 2 : index
      %149 = vector.load %arg3[%c0_66, %c2] : memref<2x49xf32, #tpu.memory_space<vmem>>, vector<2x1xf32>
      %c0_67 = arith.constant 0 : index
      %c79 = arith.constant 79 : index
      %150 = vector.load %arg7[%c0_67, %c79] : memref<2x512xf32, #tpu.memory_space<vmem>>, vector<2x256xf32>
      %151 = vector.broadcast %149 : vector<2x1xf32> to vector<2x256xf32>
      %152 = arith.mulf %151, %150 : vector<2x256xf32>
      %153 = arith.addf %148, %152 : vector<2x256xf32>
      %c0_68 = arith.constant 0 : index
      %c9 = arith.constant 9 : index
      %154 = vector.load %arg3[%c0_68, %c9] : memref<2x49xf32, #tpu.memory_space<vmem>>, vector<2x1xf32>
      %c0_69 = arith.constant 0 : index
      %c95 = arith.constant 95 : index
      %155 = vector.load %arg7[%c0_69, %c95] : memref<2x512xf32, #tpu.memory_space<vmem>>, vector<2x256xf32>
      %156 = vector.broadcast %154 : vector<2x1xf32> to vector<2x256xf32>
      %157 = arith.mulf %156, %155 : vector<2x256xf32>
      %158 = arith.addf %153, %157 : vector<2x256xf32>
      %c0_70 = arith.constant 0 : index
      %c16 = arith.constant 16 : index
      %159 = vector.load %arg3[%c0_70, %c16] : memref<2x49xf32, #tpu.memory_space<vmem>>, vector<2x1xf32>
      %c0_71 = arith.constant 0 : index
      %c111 = arith.constant 111 : index
      %160 = vector.load %arg7[%c0_71, %c111] : memref<2x512xf32, #tpu.memory_space<vmem>>, vector<2x256xf32>
      %161 = vector.broadcast %159 : vector<2x1xf32> to vector<2x256xf32>
      %162 = arith.mulf %161, %160 : vector<2x256xf32>
      %163 = arith.addf %158, %162 : vector<2x256xf32>
      %c0_72 = arith.constant 0 : index
      %c23 = arith.constant 23 : index
      %164 = vector.load %arg3[%c0_72, %c23] : memref<2x49xf32, #tpu.memory_space<vmem>>, vector<2x1xf32>
      %c0_73 = arith.constant 0 : index
      %c127 = arith.constant 127 : index
      %165 = vector.load %arg7[%c0_73, %c127] : memref<2x512xf32, #tpu.memory_space<vmem>>, vector<2x256xf32>
      %166 = vector.broadcast %164 : vector<2x1xf32> to vector<2x256xf32>
      %167 = arith.mulf %166, %165 : vector<2x256xf32>
      %168 = arith.addf %163, %167 : vector<2x256xf32>
      %c0_74 = arith.constant 0 : index
      %c30 = arith.constant 30 : index
      %169 = vector.load %arg3[%c0_74, %c30] : memref<2x49xf32, #tpu.memory_space<vmem>>, vector<2x1xf32>
      %c0_75 = arith.constant 0 : index
      %c143 = arith.constant 143 : index
      %170 = vector.load %arg7[%c0_75, %c143] : memref<2x512xf32, #tpu.memory_space<vmem>>, vector<2x256xf32>
      %171 = vector.broadcast %169 : vector<2x1xf32> to vector<2x256xf32>
      %172 = arith.mulf %171, %170 : vector<2x256xf32>
      %173 = arith.addf %168, %172 : vector<2x256xf32>
      %c0_76 = arith.constant 0 : index
      %c37 = arith.constant 37 : index
      %174 = vector.load %arg3[%c0_76, %c37] : memref<2x49xf32, #tpu.memory_space<vmem>>, vector<2x1xf32>
      %c0_77 = arith.constant 0 : index
      %c159 = arith.constant 159 : index
      %175 = vector.load %arg7[%c0_77, %c159] : memref<2x512xf32, #tpu.memory_space<vmem>>, vector<2x256xf32>
      %176 = vector.broadcast %174 : vector<2x1xf32> to vector<2x256xf32>
      %177 = arith.mulf %176, %175 : vector<2x256xf32>
      %178 = arith.addf %173, %177 : vector<2x256xf32>
      %c0_78 = arith.constant 0 : index
      %c44 = arith.constant 44 : index
      %179 = vector.load %arg3[%c0_78, %c44] : memref<2x49xf32, #tpu.memory_space<vmem>>, vector<2x1xf32>
      %c0_79 = arith.constant 0 : index
      %c175 = arith.constant 175 : index
      %180 = vector.load %arg7[%c0_79, %c175] : memref<2x512xf32, #tpu.memory_space<vmem>>, vector<2x256xf32>
      %181 = vector.broadcast %179 : vector<2x1xf32> to vector<2x256xf32>
      %182 = arith.mulf %181, %180 : vector<2x256xf32>
      %183 = arith.addf %178, %182 : vector<2x256xf32>
      %c-1_i32 = arith.constant -1 : i32
      %184 = vector.broadcast %c-1_i32 : i32 to vector<1x256xi32>
      %185 = arith.addi %46, %184 : vector<1x256xi32>
      %c0_i32_80 = arith.constant 0 : i32
      %186 = vector.broadcast %c0_i32_80 : i32 to vector<1x256xi32>
      %187 = arith.cmpi sge, %185, %186 : vector<1x256xi32>
      %c-1_i32_81 = arith.constant -1 : i32
      %188 = vector.broadcast %c-1_i32_81 : i32 to vector<1x256xi32>
      %189 = arith.addi %46, %188 : vector<1x256xi32>
      %c16_i32_82 = arith.constant 16 : i32
      %190 = vector.broadcast %c16_i32_82 : i32 to vector<1x256xi32>
      %191 = arith.cmpi slt, %189, %190 : vector<1x256xi32>
      %192 = arith.andi %187, %191 : vector<1x256xi1>
      %cst_83 = arith.constant 0.000000e+00 : f32
      %193 = vector.shape_cast %192 : vector<1x256xi1> to vector<1x256xi1>
      %194 = vector.broadcast %193 : vector<1x256xi1> to vector<2x256xi1>
      %195 = vector.broadcast %cst_83 : f32 to vector<2x256xf32>
      %196 = arith.select %194, %183, %195 : vector<2x256xi1>, vector<2x256xf32>
      %197 = arith.addf %147, %196 : vector<2x256xf32>
      %cst_84 = arith.constant 0.000000e+00 : f32
      %198 = vector.broadcast %cst_84 : f32 to vector<2x256xf32>
      %c0_85 = arith.constant 0 : index
      %c3 = arith.constant 3 : index
      %199 = vector.load %arg3[%c0_85, %c3] : memref<2x49xf32, #tpu.memory_space<vmem>>, vector<2x1xf32>
      %c0_86 = arith.constant 0 : index
      %c80 = arith.constant 80 : index
      %200 = vector.load %arg7[%c0_86, %c80] : memref<2x512xf32, #tpu.memory_space<vmem>>, vector<2x256xf32>
      %201 = vector.broadcast %199 : vector<2x1xf32> to vector<2x256xf32>
      %202 = arith.mulf %201, %200 : vector<2x256xf32>
      %203 = arith.addf %198, %202 : vector<2x256xf32>
      %c0_87 = arith.constant 0 : index
      %c10 = arith.constant 10 : index
      %204 = vector.load %arg3[%c0_87, %c10] : memref<2x49xf32, #tpu.memory_space<vmem>>, vector<2x1xf32>
      %c0_88 = arith.constant 0 : index
      %c96 = arith.constant 96 : index
      %205 = vector.load %arg7[%c0_88, %c96] : memref<2x512xf32, #tpu.memory_space<vmem>>, vector<2x256xf32>
      %206 = vector.broadcast %204 : vector<2x1xf32> to vector<2x256xf32>
      %207 = arith.mulf %206, %205 : vector<2x256xf32>
      %208 = arith.addf %203, %207 : vector<2x256xf32>
      %c0_89 = arith.constant 0 : index
      %c17 = arith.constant 17 : index
      %209 = vector.load %arg3[%c0_89, %c17] : memref<2x49xf32, #tpu.memory_space<vmem>>, vector<2x1xf32>
      %c0_90 = arith.constant 0 : index
      %c112 = arith.constant 112 : index
      %210 = vector.load %arg7[%c0_90, %c112] : memref<2x512xf32, #tpu.memory_space<vmem>>, vector<2x256xf32>
      %211 = vector.broadcast %209 : vector<2x1xf32> to vector<2x256xf32>
      %212 = arith.mulf %211, %210 : vector<2x256xf32>
      %213 = arith.addf %208, %212 : vector<2x256xf32>
      %c0_91 = arith.constant 0 : index
      %c24 = arith.constant 24 : index
      %214 = vector.load %arg3[%c0_91, %c24] : memref<2x49xf32, #tpu.memory_space<vmem>>, vector<2x1xf32>
      %c0_92 = arith.constant 0 : index
      %c128_93 = arith.constant 128 : index
      %215 = vector.load %arg7[%c0_92, %c128_93] : memref<2x512xf32, #tpu.memory_space<vmem>>, vector<2x256xf32>
      %216 = vector.broadcast %214 : vector<2x1xf32> to vector<2x256xf32>
      %217 = arith.mulf %216, %215 : vector<2x256xf32>
      %218 = arith.addf %213, %217 : vector<2x256xf32>
      %c0_94 = arith.constant 0 : index
      %c31 = arith.constant 31 : index
      %219 = vector.load %arg3[%c0_94, %c31] : memref<2x49xf32, #tpu.memory_space<vmem>>, vector<2x1xf32>
      %c0_95 = arith.constant 0 : index
      %c144 = arith.constant 144 : index
      %220 = vector.load %arg7[%c0_95, %c144] : memref<2x512xf32, #tpu.memory_space<vmem>>, vector<2x256xf32>
      %221 = vector.broadcast %219 : vector<2x1xf32> to vector<2x256xf32>
      %222 = arith.mulf %221, %220 : vector<2x256xf32>
      %223 = arith.addf %218, %222 : vector<2x256xf32>
      %c0_96 = arith.constant 0 : index
      %c38 = arith.constant 38 : index
      %224 = vector.load %arg3[%c0_96, %c38] : memref<2x49xf32, #tpu.memory_space<vmem>>, vector<2x1xf32>
      %c0_97 = arith.constant 0 : index
      %c160 = arith.constant 160 : index
      %225 = vector.load %arg7[%c0_97, %c160] : memref<2x512xf32, #tpu.memory_space<vmem>>, vector<2x256xf32>
      %226 = vector.broadcast %224 : vector<2x1xf32> to vector<2x256xf32>
      %227 = arith.mulf %226, %225 : vector<2x256xf32>
      %228 = arith.addf %223, %227 : vector<2x256xf32>
      %c0_98 = arith.constant 0 : index
      %c45 = arith.constant 45 : index
      %229 = vector.load %arg3[%c0_98, %c45] : memref<2x49xf32, #tpu.memory_space<vmem>>, vector<2x1xf32>
      %c0_99 = arith.constant 0 : index
      %c176 = arith.constant 176 : index
      %230 = vector.load %arg7[%c0_99, %c176] : memref<2x512xf32, #tpu.memory_space<vmem>>, vector<2x256xf32>
      %231 = vector.broadcast %229 : vector<2x1xf32> to vector<2x256xf32>
      %232 = arith.mulf %231, %230 : vector<2x256xf32>
      %233 = arith.addf %228, %232 : vector<2x256xf32>
      %c0_i32_100 = arith.constant 0 : i32
      %234 = vector.broadcast %c0_i32_100 : i32 to vector<1x256xi32>
      %235 = arith.addi %46, %234 : vector<1x256xi32>
      %c0_i32_101 = arith.constant 0 : i32
      %236 = vector.broadcast %c0_i32_101 : i32 to vector<1x256xi32>
      %237 = arith.cmpi sge, %235, %236 : vector<1x256xi32>
      %c0_i32_102 = arith.constant 0 : i32
      %238 = vector.broadcast %c0_i32_102 : i32 to vector<1x256xi32>
      %239 = arith.addi %46, %238 : vector<1x256xi32>
      %c16_i32_103 = arith.constant 16 : i32
      %240 = vector.broadcast %c16_i32_103 : i32 to vector<1x256xi32>
      %241 = arith.cmpi slt, %239, %240 : vector<1x256xi32>
      %242 = arith.andi %237, %241 : vector<1x256xi1>
      %cst_104 = arith.constant 0.000000e+00 : f32
      %243 = vector.shape_cast %242 : vector<1x256xi1> to vector<1x256xi1>
      %244 = vector.broadcast %243 : vector<1x256xi1> to vector<2x256xi1>
      %245 = vector.broadcast %cst_104 : f32 to vector<2x256xf32>
      %246 = arith.select %244, %233, %245 : vector<2x256xi1>, vector<2x256xf32>
      %247 = arith.addf %197, %246 : vector<2x256xf32>
      %cst_105 = arith.constant 0.000000e+00 : f32
      %248 = vector.broadcast %cst_105 : f32 to vector<2x256xf32>
      %c0_106 = arith.constant 0 : index
      %c4 = arith.constant 4 : index
      %249 = vector.load %arg3[%c0_106, %c4] : memref<2x49xf32, #tpu.memory_space<vmem>>, vector<2x1xf32>
      %c0_107 = arith.constant 0 : index
      %c81 = arith.constant 81 : index
      %250 = vector.load %arg7[%c0_107, %c81] : memref<2x512xf32, #tpu.memory_space<vmem>>, vector<2x256xf32>
      %251 = vector.broadcast %249 : vector<2x1xf32> to vector<2x256xf32>
      %252 = arith.mulf %251, %250 : vector<2x256xf32>
      %253 = arith.addf %248, %252 : vector<2x256xf32>
      %c0_108 = arith.constant 0 : index
      %c11 = arith.constant 11 : index
      %254 = vector.load %arg3[%c0_108, %c11] : memref<2x49xf32, #tpu.memory_space<vmem>>, vector<2x1xf32>
      %c0_109 = arith.constant 0 : index
      %c97 = arith.constant 97 : index
      %255 = vector.load %arg7[%c0_109, %c97] : memref<2x512xf32, #tpu.memory_space<vmem>>, vector<2x256xf32>
      %256 = vector.broadcast %254 : vector<2x1xf32> to vector<2x256xf32>
      %257 = arith.mulf %256, %255 : vector<2x256xf32>
      %258 = arith.addf %253, %257 : vector<2x256xf32>
      %c0_110 = arith.constant 0 : index
      %c18 = arith.constant 18 : index
      %259 = vector.load %arg3[%c0_110, %c18] : memref<2x49xf32, #tpu.memory_space<vmem>>, vector<2x1xf32>
      %c0_111 = arith.constant 0 : index
      %c113 = arith.constant 113 : index
      %260 = vector.load %arg7[%c0_111, %c113] : memref<2x512xf32, #tpu.memory_space<vmem>>, vector<2x256xf32>
      %261 = vector.broadcast %259 : vector<2x1xf32> to vector<2x256xf32>
      %262 = arith.mulf %261, %260 : vector<2x256xf32>
      %263 = arith.addf %258, %262 : vector<2x256xf32>
      %c0_112 = arith.constant 0 : index
      %c25 = arith.constant 25 : index
      %264 = vector.load %arg3[%c0_112, %c25] : memref<2x49xf32, #tpu.memory_space<vmem>>, vector<2x1xf32>
      %c0_113 = arith.constant 0 : index
      %c129 = arith.constant 129 : index
      %265 = vector.load %arg7[%c0_113, %c129] : memref<2x512xf32, #tpu.memory_space<vmem>>, vector<2x256xf32>
      %266 = vector.broadcast %264 : vector<2x1xf32> to vector<2x256xf32>
      %267 = arith.mulf %266, %265 : vector<2x256xf32>
      %268 = arith.addf %263, %267 : vector<2x256xf32>
      %c0_114 = arith.constant 0 : index
      %c32 = arith.constant 32 : index
      %269 = vector.load %arg3[%c0_114, %c32] : memref<2x49xf32, #tpu.memory_space<vmem>>, vector<2x1xf32>
      %c0_115 = arith.constant 0 : index
      %c145 = arith.constant 145 : index
      %270 = vector.load %arg7[%c0_115, %c145] : memref<2x512xf32, #tpu.memory_space<vmem>>, vector<2x256xf32>
      %271 = vector.broadcast %269 : vector<2x1xf32> to vector<2x256xf32>
      %272 = arith.mulf %271, %270 : vector<2x256xf32>
      %273 = arith.addf %268, %272 : vector<2x256xf32>
      %c0_116 = arith.constant 0 : index
      %c39 = arith.constant 39 : index
      %274 = vector.load %arg3[%c0_116, %c39] : memref<2x49xf32, #tpu.memory_space<vmem>>, vector<2x1xf32>
      %c0_117 = arith.constant 0 : index
      %c161 = arith.constant 161 : index
      %275 = vector.load %arg7[%c0_117, %c161] : memref<2x512xf32, #tpu.memory_space<vmem>>, vector<2x256xf32>
      %276 = vector.broadcast %274 : vector<2x1xf32> to vector<2x256xf32>
      %277 = arith.mulf %276, %275 : vector<2x256xf32>
      %278 = arith.addf %273, %277 : vector<2x256xf32>
      %c0_118 = arith.constant 0 : index
      %c46 = arith.constant 46 : index
      %279 = vector.load %arg3[%c0_118, %c46] : memref<2x49xf32, #tpu.memory_space<vmem>>, vector<2x1xf32>
      %c0_119 = arith.constant 0 : index
      %c177 = arith.constant 177 : index
      %280 = vector.load %arg7[%c0_119, %c177] : memref<2x512xf32, #tpu.memory_space<vmem>>, vector<2x256xf32>
      %281 = vector.broadcast %279 : vector<2x1xf32> to vector<2x256xf32>
      %282 = arith.mulf %281, %280 : vector<2x256xf32>
      %283 = arith.addf %278, %282 : vector<2x256xf32>
      %c1_i32_120 = arith.constant 1 : i32
      %284 = vector.broadcast %c1_i32_120 : i32 to vector<1x256xi32>
      %285 = arith.addi %46, %284 : vector<1x256xi32>
      %c0_i32_121 = arith.constant 0 : i32
      %286 = vector.broadcast %c0_i32_121 : i32 to vector<1x256xi32>
      %287 = arith.cmpi sge, %285, %286 : vector<1x256xi32>
      %c1_i32_122 = arith.constant 1 : i32
      %288 = vector.broadcast %c1_i32_122 : i32 to vector<1x256xi32>
      %289 = arith.addi %46, %288 : vector<1x256xi32>
      %c16_i32_123 = arith.constant 16 : i32
      %290 = vector.broadcast %c16_i32_123 : i32 to vector<1x256xi32>
      %291 = arith.cmpi slt, %289, %290 : vector<1x256xi32>
      %292 = arith.andi %287, %291 : vector<1x256xi1>
      %cst_124 = arith.constant 0.000000e+00 : f32
      %293 = vector.shape_cast %292 : vector<1x256xi1> to vector<1x256xi1>
      %294 = vector.broadcast %293 : vector<1x256xi1> to vector<2x256xi1>
      %295 = vector.broadcast %cst_124 : f32 to vector<2x256xf32>
      %296 = arith.select %294, %283, %295 : vector<2x256xi1>, vector<2x256xf32>
      %297 = arith.addf %247, %296 : vector<2x256xf32>
      %cst_125 = arith.constant 0.000000e+00 : f32
      %298 = vector.broadcast %cst_125 : f32 to vector<2x256xf32>
      %c0_126 = arith.constant 0 : index
      %c5 = arith.constant 5 : index
      %299 = vector.load %arg3[%c0_126, %c5] : memref<2x49xf32, #tpu.memory_space<vmem>>, vector<2x1xf32>
      %c0_127 = arith.constant 0 : index
      %c82 = arith.constant 82 : index
      %300 = vector.load %arg7[%c0_127, %c82] : memref<2x512xf32, #tpu.memory_space<vmem>>, vector<2x256xf32>
      %301 = vector.broadcast %299 : vector<2x1xf32> to vector<2x256xf32>
      %302 = arith.mulf %301, %300 : vector<2x256xf32>
      %303 = arith.addf %298, %302 : vector<2x256xf32>
      %c0_128 = arith.constant 0 : index
      %c12 = arith.constant 12 : index
      %304 = vector.load %arg3[%c0_128, %c12] : memref<2x49xf32, #tpu.memory_space<vmem>>, vector<2x1xf32>
      %c0_129 = arith.constant 0 : index
      %c98 = arith.constant 98 : index
      %305 = vector.load %arg7[%c0_129, %c98] : memref<2x512xf32, #tpu.memory_space<vmem>>, vector<2x256xf32>
      %306 = vector.broadcast %304 : vector<2x1xf32> to vector<2x256xf32>
      %307 = arith.mulf %306, %305 : vector<2x256xf32>
      %308 = arith.addf %303, %307 : vector<2x256xf32>
      %c0_130 = arith.constant 0 : index
      %c19 = arith.constant 19 : index
      %309 = vector.load %arg3[%c0_130, %c19] : memref<2x49xf32, #tpu.memory_space<vmem>>, vector<2x1xf32>
      %c0_131 = arith.constant 0 : index
      %c114 = arith.constant 114 : index
      %310 = vector.load %arg7[%c0_131, %c114] : memref<2x512xf32, #tpu.memory_space<vmem>>, vector<2x256xf32>
      %311 = vector.broadcast %309 : vector<2x1xf32> to vector<2x256xf32>
      %312 = arith.mulf %311, %310 : vector<2x256xf32>
      %313 = arith.addf %308, %312 : vector<2x256xf32>
      %c0_132 = arith.constant 0 : index
      %c26 = arith.constant 26 : index
      %314 = vector.load %arg3[%c0_132, %c26] : memref<2x49xf32, #tpu.memory_space<vmem>>, vector<2x1xf32>
      %c0_133 = arith.constant 0 : index
      %c130 = arith.constant 130 : index
      %315 = vector.load %arg7[%c0_133, %c130] : memref<2x512xf32, #tpu.memory_space<vmem>>, vector<2x256xf32>
      %316 = vector.broadcast %314 : vector<2x1xf32> to vector<2x256xf32>
      %317 = arith.mulf %316, %315 : vector<2x256xf32>
      %318 = arith.addf %313, %317 : vector<2x256xf32>
      %c0_134 = arith.constant 0 : index
      %c33 = arith.constant 33 : index
      %319 = vector.load %arg3[%c0_134, %c33] : memref<2x49xf32, #tpu.memory_space<vmem>>, vector<2x1xf32>
      %c0_135 = arith.constant 0 : index
      %c146 = arith.constant 146 : index
      %320 = vector.load %arg7[%c0_135, %c146] : memref<2x512xf32, #tpu.memory_space<vmem>>, vector<2x256xf32>
      %321 = vector.broadcast %319 : vector<2x1xf32> to vector<2x256xf32>
      %322 = arith.mulf %321, %320 : vector<2x256xf32>
      %323 = arith.addf %318, %322 : vector<2x256xf32>
      %c0_136 = arith.constant 0 : index
      %c40 = arith.constant 40 : index
      %324 = vector.load %arg3[%c0_136, %c40] : memref<2x49xf32, #tpu.memory_space<vmem>>, vector<2x1xf32>
      %c0_137 = arith.constant 0 : index
      %c162 = arith.constant 162 : index
      %325 = vector.load %arg7[%c0_137, %c162] : memref<2x512xf32, #tpu.memory_space<vmem>>, vector<2x256xf32>
      %326 = vector.broadcast %324 : vector<2x1xf32> to vector<2x256xf32>
      %327 = arith.mulf %326, %325 : vector<2x256xf32>
      %328 = arith.addf %323, %327 : vector<2x256xf32>
      %c0_138 = arith.constant 0 : index
      %c47 = arith.constant 47 : index
      %329 = vector.load %arg3[%c0_138, %c47] : memref<2x49xf32, #tpu.memory_space<vmem>>, vector<2x1xf32>
      %c0_139 = arith.constant 0 : index
      %c178 = arith.constant 178 : index
      %330 = vector.load %arg7[%c0_139, %c178] : memref<2x512xf32, #tpu.memory_space<vmem>>, vector<2x256xf32>
      %331 = vector.broadcast %329 : vector<2x1xf32> to vector<2x256xf32>
      %332 = arith.mulf %331, %330 : vector<2x256xf32>
      %333 = arith.addf %328, %332 : vector<2x256xf32>
      %c2_i32 = arith.constant 2 : i32
      %334 = vector.broadcast %c2_i32 : i32 to vector<1x256xi32>
      %335 = arith.addi %46, %334 : vector<1x256xi32>
      %c0_i32_140 = arith.constant 0 : i32
      %336 = vector.broadcast %c0_i32_140 : i32 to vector<1x256xi32>
      %337 = arith.cmpi sge, %335, %336 : vector<1x256xi32>
      %c2_i32_141 = arith.constant 2 : i32
      %338 = vector.broadcast %c2_i32_141 : i32 to vector<1x256xi32>
      %339 = arith.addi %46, %338 : vector<1x256xi32>
      %c16_i32_142 = arith.constant 16 : i32
      %340 = vector.broadcast %c16_i32_142 : i32 to vector<1x256xi32>
      %341 = arith.cmpi slt, %339, %340 : vector<1x256xi32>
      %342 = arith.andi %337, %341 : vector<1x256xi1>
      %cst_143 = arith.constant 0.000000e+00 : f32
      %343 = vector.shape_cast %342 : vector<1x256xi1> to vector<1x256xi1>
      %344 = vector.broadcast %343 : vector<1x256xi1> to vector<2x256xi1>
      %345 = vector.broadcast %cst_143 : f32 to vector<2x256xf32>
      %346 = arith.select %344, %333, %345 : vector<2x256xi1>, vector<2x256xf32>
      %347 = arith.addf %297, %346 : vector<2x256xf32>
      %cst_144 = arith.constant 0.000000e+00 : f32
      %348 = vector.broadcast %cst_144 : f32 to vector<2x256xf32>
      %c0_145 = arith.constant 0 : index
      %c6 = arith.constant 6 : index
      %349 = vector.load %arg3[%c0_145, %c6] : memref<2x49xf32, #tpu.memory_space<vmem>>, vector<2x1xf32>
      %c0_146 = arith.constant 0 : index
      %c83 = arith.constant 83 : index
      %350 = vector.load %arg7[%c0_146, %c83] : memref<2x512xf32, #tpu.memory_space<vmem>>, vector<2x256xf32>
      %351 = vector.broadcast %349 : vector<2x1xf32> to vector<2x256xf32>
      %352 = arith.mulf %351, %350 : vector<2x256xf32>
      %353 = arith.addf %348, %352 : vector<2x256xf32>
      %c0_147 = arith.constant 0 : index
      %c13 = arith.constant 13 : index
      %354 = vector.load %arg3[%c0_147, %c13] : memref<2x49xf32, #tpu.memory_space<vmem>>, vector<2x1xf32>
      %c0_148 = arith.constant 0 : index
      %c99 = arith.constant 99 : index
      %355 = vector.load %arg7[%c0_148, %c99] : memref<2x512xf32, #tpu.memory_space<vmem>>, vector<2x256xf32>
      %356 = vector.broadcast %354 : vector<2x1xf32> to vector<2x256xf32>
      %357 = arith.mulf %356, %355 : vector<2x256xf32>
      %358 = arith.addf %353, %357 : vector<2x256xf32>
      %c0_149 = arith.constant 0 : index
      %c20 = arith.constant 20 : index
      %359 = vector.load %arg3[%c0_149, %c20] : memref<2x49xf32, #tpu.memory_space<vmem>>, vector<2x1xf32>
      %c0_150 = arith.constant 0 : index
      %c115 = arith.constant 115 : index
      %360 = vector.load %arg7[%c0_150, %c115] : memref<2x512xf32, #tpu.memory_space<vmem>>, vector<2x256xf32>
      %361 = vector.broadcast %359 : vector<2x1xf32> to vector<2x256xf32>
      %362 = arith.mulf %361, %360 : vector<2x256xf32>
      %363 = arith.addf %358, %362 : vector<2x256xf32>
      %c0_151 = arith.constant 0 : index
      %c27 = arith.constant 27 : index
      %364 = vector.load %arg3[%c0_151, %c27] : memref<2x49xf32, #tpu.memory_space<vmem>>, vector<2x1xf32>
      %c0_152 = arith.constant 0 : index
      %c131 = arith.constant 131 : index
      %365 = vector.load %arg7[%c0_152, %c131] : memref<2x512xf32, #tpu.memory_space<vmem>>, vector<2x256xf32>
      %366 = vector.broadcast %364 : vector<2x1xf32> to vector<2x256xf32>
      %367 = arith.mulf %366, %365 : vector<2x256xf32>
      %368 = arith.addf %363, %367 : vector<2x256xf32>
      %c0_153 = arith.constant 0 : index
      %c34 = arith.constant 34 : index
      %369 = vector.load %arg3[%c0_153, %c34] : memref<2x49xf32, #tpu.memory_space<vmem>>, vector<2x1xf32>
      %c0_154 = arith.constant 0 : index
      %c147 = arith.constant 147 : index
      %370 = vector.load %arg7[%c0_154, %c147] : memref<2x512xf32, #tpu.memory_space<vmem>>, vector<2x256xf32>
      %371 = vector.broadcast %369 : vector<2x1xf32> to vector<2x256xf32>
      %372 = arith.mulf %371, %370 : vector<2x256xf32>
      %373 = arith.addf %368, %372 : vector<2x256xf32>
      %c0_155 = arith.constant 0 : index
      %c41 = arith.constant 41 : index
      %374 = vector.load %arg3[%c0_155, %c41] : memref<2x49xf32, #tpu.memory_space<vmem>>, vector<2x1xf32>
      %c0_156 = arith.constant 0 : index
      %c163 = arith.constant 163 : index
      %375 = vector.load %arg7[%c0_156, %c163] : memref<2x512xf32, #tpu.memory_space<vmem>>, vector<2x256xf32>
      %376 = vector.broadcast %374 : vector<2x1xf32> to vector<2x256xf32>
      %377 = arith.mulf %376, %375 : vector<2x256xf32>
      %378 = arith.addf %373, %377 : vector<2x256xf32>
      %c0_157 = arith.constant 0 : index
      %c48 = arith.constant 48 : index
      %379 = vector.load %arg3[%c0_157, %c48] : memref<2x49xf32, #tpu.memory_space<vmem>>, vector<2x1xf32>
      %c0_158 = arith.constant 0 : index
      %c179 = arith.constant 179 : index
      %380 = vector.load %arg7[%c0_158, %c179] : memref<2x512xf32, #tpu.memory_space<vmem>>, vector<2x256xf32>
      %381 = vector.broadcast %379 : vector<2x1xf32> to vector<2x256xf32>
      %382 = arith.mulf %381, %380 : vector<2x256xf32>
      %383 = arith.addf %378, %382 : vector<2x256xf32>
      %c3_i32 = arith.constant 3 : i32
      %384 = vector.broadcast %c3_i32 : i32 to vector<1x256xi32>
      %385 = arith.addi %46, %384 : vector<1x256xi32>
      %c0_i32_159 = arith.constant 0 : i32
      %386 = vector.broadcast %c0_i32_159 : i32 to vector<1x256xi32>
      %387 = arith.cmpi sge, %385, %386 : vector<1x256xi32>
      %c3_i32_160 = arith.constant 3 : i32
      %388 = vector.broadcast %c3_i32_160 : i32 to vector<1x256xi32>
      %389 = arith.addi %46, %388 : vector<1x256xi32>
      %c16_i32_161 = arith.constant 16 : i32
      %390 = vector.broadcast %c16_i32_161 : i32 to vector<1x256xi32>
      %391 = arith.cmpi slt, %389, %390 : vector<1x256xi32>
      %392 = arith.andi %387, %391 : vector<1x256xi1>
      %cst_162 = arith.constant 0.000000e+00 : f32
      %393 = vector.shape_cast %392 : vector<1x256xi1> to vector<1x256xi1>
      %394 = vector.broadcast %393 : vector<1x256xi1> to vector<2x256xi1>
      %395 = vector.broadcast %cst_162 : f32 to vector<2x256xf32>
      %396 = arith.select %394, %383, %395 : vector<2x256xi1>, vector<2x256xf32>
      %397 = arith.addf %347, %396 : vector<2x256xf32>
      %cst_163 = arith.constant dense<0.000000e+00> : vector<256xf32>
      %398 = vector.multi_reduction <add>, %397, %cst_163 [0] : vector<2x256xf32> to vector<256xf32>
      %399 = vector.shape_cast %398 : vector<256xf32> to vector<1x256xf32>
      %c0_164 = arith.constant 0 : index
      %400 = memref.load %arg4[%c0_164] : memref<2xf32, #tpu.memory_space<smem>>
      %401 = vector.broadcast %400 : f32 to vector<1x256xf32>
      %402 = arith.mulf %399, %401 : vector<1x256xf32>
      %c1_165 = arith.constant 1 : index
      %403 = memref.load %arg4[%c1_165] : memref<2xf32, #tpu.memory_space<smem>>
      %404 = vector.broadcast %403 : f32 to vector<1x256xf32>
      %405 = arith.addf %402, %404 : vector<1x256xf32>
      %cst_166 = arith.constant 0.000000e+00 : f32
      %406 = vector.broadcast %cst_166 : f32 to vector<1x256xf32>
      %407 = arith.subf %406, %405 : vector<1x256xf32>
      %408 = math.exp %407 : vector<1x256xf32>
      %cst_167 = arith.constant 1.000000e+00 : f32
      %409 = vector.broadcast %cst_167 : f32 to vector<1x256xf32>
      %410 = arith.addf %409, %408 : vector<1x256xf32>
      %411 = tpu.reciprocal %410 : vector<1x256xf32> -> vector<1x256xf32>
      %c0_168 = arith.constant 0 : index
      %c0_169 = arith.constant 0 : index
      %412 = vector.load %arg8[%c0_168, %c0_169] : memref<1x256xf32, #tpu.memory_space<vmem>>, vector<1x256xf32>
      tpu.vector_store %arg8[%c0_168, %c0_169], %411 {strides = array<i32>} : memref<1x256xf32, #tpu.memory_space<vmem>>, vector<1x256xf32>,
    } else {
    }
    %c1_i32 = arith.constant 1 : i32
    %3 = arith.muli %arg1, %c1_i32 : i32
    %4 = arith.addi %3, %arg2 : i32
    %c4_i32 = arith.constant 4 : i32
    %5 = arith.muli %4, %c4_i32 : i32
    %6 = tpu.assume_multiple %5, 4 : i32
    %c0 = arith.constant 0 : index
    %7 = arith.index_cast %6 : i32 to index
    %c0_1 = arith.constant 0 : index
    %8 = vector.load %arg5[%c0, %7, %c0_1] : memref<1x4x256xf32, #tpu.memory_space<vmem>>, vector<1x4x256xf32>
    %9 = vector.shape_cast %8 : vector<1x4x256xf32> to vector<4x256xf32>
    %c0_2 = arith.constant 0 : index
    %c0_3 = arith.constant 0 : index
    %10 = vector.load %arg8[%c0_2, %c0_3] : memref<1x256xf32, #tpu.memory_space<vmem>>, vector<1x256xf32>
    %11 = vector.broadcast %10 : vector<1x256xf32> to vector<4x256xf32>
    %12 = arith.mulf %9, %11 : vector<4x256xf32>
    %c0_4 = arith.constant 0 : index
    %c0_5 = arith.constant 0 : index
    %c0_6 = arith.constant 0 : index
    %13 = vector.load %arg6[%c0_4, %c0_5, %c0_6] : memref<1x4x256xf32, #tpu.memory_space<vmem>>, vector<1x4x256xf32>
    %14 = vector.shape_cast %13 : vector<1x4x256xf32> to vector<4x256xf32>
    %15 = vector.shape_cast %12 : vector<4x256xf32> to vector<1x4x256xf32>
    tpu.vector_store %arg6[%c0_4, %c0_5, %c0_6], %15 {strides = array<i32>} : memref<1x4x256xf32, #tpu.memory_space<vmem>>, vector<1x4x256xf32>,
    return
  }
  func.func @transform_0(%arg0: i32, %arg1: i32, %arg2: i32) -> (i32, i32) {
    %c0_i32 = arith.constant 0 : i32
    %c0_i32_0 = arith.constant 0 : i32
    %c0_i32_1 = arith.constant 0 : i32
    return %c0_i32, %c0_i32_0 : i32, i32
  }
  func.func @transform_1(%arg0: i32, %arg1: i32, %arg2: i32) -> i32 {
    %c0_i32 = arith.constant 0 : i32
    %c0_i32_0 = arith.constant 0 : i32
    return %c0_i32 : i32
  }
  func.func @transform_2(%arg0: i32, %arg1: i32, %arg2: i32) -> (i32, i32, i32) {
    %c0_i32 = arith.constant 0 : i32
    %c0_i32_0 = arith.constant 0 : i32
    %c0_i32_1 = arith.constant 0 : i32
    return %arg0, %c0_i32, %c0_i32_0 : i32, i32, i32
  }
  func.func @transform_3(%arg0: i32, %arg1: i32, %arg2: i32) -> (i32, i32, i32) {
    %c1_i32 = arith.constant 1 : i32
    %0 = arith.muli %arg1, %c1_i32 : i32
    %1 = arith.addi %0, %arg2 : i32
    %c0_i32 = arith.constant 0 : i32
    %c0_i32_0 = arith.constant 0 : i32
    return %arg0, %1, %c0_i32 : i32, i32, i32
  }
}

</mosaic_0001>

<llo_original>
// kernel: tpu_custom_call.1
$region0: #{tpu_custom_call.1}
  #allocation0 [shape = 'u32[]', space=smem, size = 0x4, offset = 0x4, fixed_abs, tag = 'smem constant byte address 0x4 - core index']
  #allocation1 [shape = 'u32[144,128]{1,0:T(1,128)}', space=vmem, size = 0x12000, scoped, tag = 'internal scratch']
  #allocation2 [shape = 'f32[2,512]{1,0:T(2,128)}', space=vmem, size = 0x1000, scoped, tag = 'scratch operand']
  #allocation3 [shape = 'f32[1,256]{1,0:T(1,128)}', space=vmem, size = 0x400, scoped, tag = 'scratch operand']
  %s0 = inlined_call_operand.hbm [shape: f32[2,49], index: 0, kind: input, shape index: {}]
  %s1 = inlined_call_operand.vmem [shape: f32[2], index: 1, kind: input, shape index: {}]
  %s2 = inlined_call_operand.hbm [shape: f32[2,4,256], index: 2, kind: input, shape index: {}]
  %s3 = inlined_call_operand.hbm [shape: f32[2,4,256], index: 3, kind: output, shape index: {}]
  %s4 = sld [smem:[#allocation0]]
  $region61: #{tpu_custom_call.1} parent=0
    _
  %s6 = ssub.s32 1, %s4
  %s7 = scalar_select 0, %s6, %s4
  $region1: #{tpu_custom_call.1} parent=0
    #allocation4 [shape = 'u8[1024]{0}', space=vmem, size = 0x400, scoped, tag = 'input window, operand 0, single buffered']
    #allocation5 [shape = 's32[2]{0}', space=sflag, size = 0x8, scoped, tag = 'scoped memory for tpu_custom_call.1']
    #allocation6 [shape = 's32[2]{0}', space=sflag, size = 0x8, scoped, tag = 'scoped memory for tpu_custom_call.1']
    #allocation7 [shape = 's32[2]{0}', space=sflag, size = 0x8, scoped, tag = 'scoped memory for tpu_custom_call.1']
    #allocation8 [shape = 'u8[512]{0}', space=smem, size = 0x200, scoped, tag = 'input window, operand 1, single buffered']
    #allocation9 [shape = 'u8[8192]{0}', space=vmem, size = 0x2000, scoped, tag = 'input window, operand 2']
    #allocation10 [shape = 's32[2]{0}', space=sflag, size = 0x8, scoped, tag = 'scoped memory for tpu_custom_call.1']
    #allocation11 [shape = 'u8[8192]{0}', space=vmem, size = 0x2000, scoped, tag = 'output window, operand 0']
    %8 = vsyncpa [#allocation5], 0
    %9 = vsyncpa [#allocation7], 0
    %10 = vsyncpa [#allocation10], 0
    %s11 = scalar_lea.sflag [#allocation10], 1
    %12 = vsyncpa %s11, 0
    %13 = vsyncpa [#allocation6], 0
    %s14 = scalar_lea.sflag [#allocation6], 1
    %15 = vsyncpa %s14, 0
    loop: start=0, step=1, limit=4
    $region2: #{tpu_custom_call.1} parent=1 // loop_pre_header
      _
    $region3: #{tpu_custom_call.1} parent=1 // loop_header
      %s17 = sphi 0, %s21
      %p18 = scmp.ge.s32.totalorder %s17, 4
      %s24 = sphi 0, %s43
      %s25 = sphi 0, %s39
      %s26 = sphi 0, %s35
      %s27 = sphi 0, %s24
      %s28 = sphi 0, %s25
      %s29 = sphi 0, %s26
      %s30 = sphi 0, %s27
      %s31 = sphi 0, %s28
      %s32 = sphi 0, %s29
      %s44 = sphi 0, %s44
      %s46 = sphi 0, %s44
      %s47 = sphi 0, %s46
      %s61 = sphi 0, %s47
      %s65 = sphi 0, %s65
      %s67 = sphi 0, %s65
      %s68 = sphi 0, %s67
      %s82 = sphi 0, %s68
      %s88 = sphi 0, %s90
      %s91 = sphi 0, %s88
      %s92 = sphi 0, %s91
      %s108 = sphi 0, %s92
      %s118 = sphi 0, %s120
      %s121 = sphi 0, %s118
      %s122 = sphi 0, %s121
      %s138 = sphi 0, %s122
    $region4: #{tpu_custom_call.1} parent=1 // loop_header_branch
      %20 = sbr.rel (%p18) target = $region8
    $region5: #{tpu_custom_call.1} parent=1 // loop_body
      %s22 = ssub.s32 %s17, 1
      %s23 = ssub.s32 %s17, 2
      %s33 = sadd.s32 1, %s26
      %p34 = scmp.ge.s32.totalorder %s33, 1
      %s35 = scalar_select %p34, 0, %s33
      %s36 = sadd.s32 1, %s25
      %s37 = scalar_select %p34, %s36, %s25
      %p38 = scmp.ge.s32.totalorder %s37, 1
      %s39 = scalar_select %p38, 0, %s37
      %s40 = sadd.s32 1, %s24
      %s41 = scalar_select %p38, %s40, %s24
      %p42 = scmp.ge.s32.totalorder %s41, 2
      %s43 = scalar_select %p42, 0, %s41
      %s45 = sadd.s32 %s44, 1
      %p48 = scmp.eq.s32.totalorder %s17, 1
      %p49 = scmp.ne.s32.totalorder %s44, %s46
      %p50 = scmp.eq.s32.totalorder %s17, 0
      %p51 = por %p49, %p50
      %p52 = scmp.ne.s32.totalorder %s44, %s46
      %p53 = scmp.eq.s32.totalorder %s22, 1
      %p54 = por %p52, %p53
      %p55 = scmp.ne.s32.totalorder %s46, %s47
      %p56 = scmp.eq.s32.totalorder %s22, 0
      %p57 = por %p55, %p56
      %p58 = scmp.ne.s32.totalorder %s46, %s47
      %p59 = scmp.eq.s32.totalorder %s23, 1
      %p60 = por %p58, %p59
      %p62 = scmp.ne.s32.totalorder %s47, %s61
      %p63 = scmp.eq.s32.totalorder %s23, 0
      %p64 = por %p62, %p63
      %s66 = sadd.s32 %s65, 1
      %p69 = scmp.eq.s32.totalorder %s17, 1
      %p70 = scmp.ne.s32.totalorder %s65, %s67
      %p71 = scmp.eq.s32.totalorder %s17, 0
      %p72 = por %p70, %p71
      %p73 = scmp.ne.s32.totalorder %s65, %s67
      %p74 = scmp.eq.s32.totalorder %s22, 1
      %p75 = por %p73, %p74
      %p76 = scmp.ne.s32.totalorder %s67, %s68
      %p77 = scmp.eq.s32.totalorder %s22, 0
      %p78 = por %p76, %p77
      %p79 = scmp.ne.s32.totalorder %s67, %s68
      %p80 = scmp.eq.s32.totalorder %s23, 1
      %p81 = por %p79, %p80
      %p83 = scmp.ne.s32.totalorder %s68, %s82
      %p84 = scmp.eq.s32.totalorder %s23, 0
      %p85 = por %p83, %p84
      %s86 = ssub.s32 %s24, %s43
      %p87 = scmp.eq.s32.totalorder %s86, 0
      %s89 = sadd.s32 %s88, 1
      %s90 = scalar_select %p87, %s88, %s89
      %p93 = pneg %p87
      %p94 = scmp.eq.s32.totalorder %s17, 1
      %p95 = por %p93, %p94
      %p96 = scmp.ne.s32.totalorder %s88, %s91
      %p97 = scmp.eq.s32.totalorder %s17, 0
      %p98 = por %p96, %p97
      %p99 = scmp.ne.s32.totalorder %s88, %s91
      %p100 = scmp.eq.s32.totalorder %s22, 1
      %p101 = por %p99, %p100
      %p102 = scmp.ne.s32.totalorder %s91, %s92
      %p103 = scmp.eq.s32.totalorder %s22, 0
      %p104 = por %p102, %p103
      %p105 = scmp.ne.s32.totalorder %s91, %s92
      %p106 = scmp.eq.s32.totalorder %s23, 1
      %p107 = por %p105, %p106
      %p109 = scmp.ne.s32.totalorder %s92, %s108
      %p110 = scmp.eq.s32.totalorder %s23, 0
      %p111 = por %p109, %p110
      %s112 = sadd.s32 %s25, %s26
      %s113 = sadd.s32 %s39, %s35
      %s114 = ssub.s32 %s24, %s43
      %s115 = ssub.s32 %s112, %s113
      %s116 = sor.u32 %s114, %s115
      %p117 = scmp.eq.s32.totalorder %s116, 0
      %s119 = sadd.s32 %s118, 1
      %s120 = scalar_select %p117, %s118, %s119
      %p123 = pneg %p117
      %p124 = scmp.eq.s32.totalorder %s17, 1
      %p125 = por %p123, %p124
      %p126 = scmp.ne.s32.totalorder %s118, %s121
      %p127 = scmp.eq.s32.totalorder %s17, 0
      %p128 = por %p126, %p127
      %p129 = scmp.ne.s32.totalorder %s118, %s121
      %p130 = scmp.eq.s32.totalorder %s22, 1
      %p131 = por %p129, %p130
      %p132 = scmp.ne.s32.totalorder %s121, %s122
      %p133 = scmp.eq.s32.totalorder %s22, 0
      %p134 = por %p132, %p133
      %p135 = scmp.ne.s32.totalorder %s121, %s122
      %p136 = scmp.eq.s32.totalorder %s23, 1
      %p137 = por %p135, %p136
      %p139 = scmp.ne.s32.totalorder %s122, %s138
      %p140 = scmp.eq.s32.totalorder %s23, 0
      %p141 = por %p139, %p140
      %p142 = scmp.le.s32.totalorder 1, %s17
      %p143 = scmp.lt.s32.totalorder %s17, 3
      %p144 = pnand %p142, %p143
      %p145 = pneg %p144
      // Predicated region
      $region9: #{tpu_custom_call.1} parent=5 // pred_check
        _
      $region10: #{tpu_custom_call.1} parent=5 // pred_check_branch
        %147 = sbr.rel (%p144) target = $region12
      $region11: #{tpu_custom_call.1} parent=5 // pred_region
        %s148 = ssub.s32 %s17, 1
        // Predicated region
        $region13: #{tpu_custom_call.1} parent=11 // pred_check
          %p149 = pneg %p57
        $region14: #{tpu_custom_call.1} parent=11 // pred_check_branch
          %151 = sbr.rel (%p149) target = $region16
        $region15: #{tpu_custom_call.1} parent=11 // pred_region
          %s153 = ssub.s32 32, 32
          %154 = vsyncadd [#allocation5], %s153
          %s156 = sshll.u32 [#allocation4], 4
          %s157 = int_to_ptr.vmem [resolvable:$true] %s156
          %159 = dma.hbm_to_vmem [thread:$0]  %s0, 32, %s157, [#allocation5]
        $region16: #{tpu_custom_call.1} parent=11 // pred_fallthru
          _
        // Predicated region
        $region17: #{tpu_custom_call.1} parent=11 // pred_check
          %p160 = pneg %p78
        $region18: #{tpu_custom_call.1} parent=11 // pred_check_branch
          %162 = sbr.rel (%p160) target = $region20
        $region19: #{tpu_custom_call.1} parent=11 // pred_region
          %s164 = ssub.s32 16, 16
          %165 = vsyncadd [#allocation7], %s164
          %s167 = sshll.u32 %s1, 4
          %s168 = int_to_ptr.vmem [resolvable:$true] %s167
          %170 = dma.vmem_to_smem %s168, 16, [#allocation8], [#allocation7]
        $region20: #{tpu_custom_call.1} parent=11 // pred_fallthru
          _
      $region12: #{tpu_custom_call.1} parent=5 // pred_fallthru
        _
      %p171 = scmp.lt.s32.totalorder %s17, 2
      // Predicated region
      $region21: #{tpu_custom_call.1} parent=5 // pred_check
        %p172 = pneg %p171
      $region22: #{tpu_custom_call.1} parent=5 // pred_check_branch
        %174 = sbr.rel (%p172) target = $region24
      $region23: #{tpu_custom_call.1} parent=5 // pred_region
        // Predicated region
        $region25: #{tpu_custom_call.1} parent=23 // pred_check
          %p175 = pneg %p98
        $region26: #{tpu_custom_call.1} parent=23 // pred_check_branch
          %177 = sbr.rel (%p175) target = $region28
        $region27: #{tpu_custom_call.1} parent=23 // pred_region
          %s178 = sand.u32 %s88, 1
          %s179 = scalar_lea.sflag [#allocation10], %s178
          %s180 = sand.u32 %s88, 1
          %s181 = smul.addr %s180, 8
          %s182 = scalar_lea.vmem [#allocation9], %s181
          %s184 = ssub.s32 128, 128
          %185 = vsyncadd %s179, %s184
          %s186 = smul.addr %s24, 2
          %s187 = smul.addr %s186, 64
          %s188 = scalar_lea.hbm %s2, %s187
          %s190 = sshll.u32 %s182, 4
          %s191 = int_to_ptr.vmem [resolvable:$true] %s190
          %193 = dma.hbm_to_vmem [thread:$0]  %s188, 128, %s191, %s179
        $region28: #{tpu_custom_call.1} parent=23 // pred_fallthru
          _
      $region24: #{tpu_custom_call.1} parent=5 // pred_fallthru
        _
      %p194 = scmp.le.s32.totalorder 1, %s17
      %p195 = scmp.lt.s32.totalorder %s17, 3
      %p196 = pnand %p194, %p195
      %p197 = pneg %p196
      // Predicated region
      $region29: #{tpu_custom_call.1} parent=5 // pred_check
        _
      $region30: #{tpu_custom_call.1} parent=5 // pred_check_branch
        %199 = sbr.rel (%p196) target = $region32
      $region31: #{tpu_custom_call.1} parent=5 // pred_region
        %s200 = ssub.s32 %s17, 1
        // Predicated region
        $region33: #{tpu_custom_call.1} parent=31 // pred_check
          %p201 = pneg %p57
        $region34: #{tpu_custom_call.1} parent=31 // pred_check_branch
          %203 = sbr.rel (%p201) target = $region36
        $region35: #{tpu_custom_call.1} parent=31 // pred_region
          %204 = dma.done [#allocation5], 32
        $region36: #{tpu_custom_call.1} parent=31 // pred_fallthru
          _
        // Predicated region
        $region37: #{tpu_custom_call.1} parent=31 // pred_check
          %p205 = pneg %p78
        $region38: #{tpu_custom_call.1} parent=31 // pred_check_branch
          %207 = sbr.rel (%p205) target = $region40
        $region39: #{tpu_custom_call.1} parent=31 // pred_region
          %208 = dma.done [#allocation7], 16
        $region40: #{tpu_custom_call.1} parent=31 // pred_fallthru
          _
        %s209 = sand.u32 %s91, 1
        %s210 = scalar_lea.sflag [#allocation10], %s209
        %s211 = sand.u32 %s91, 1
        %s212 = smul.addr %s211, 8
        %s213 = scalar_lea.vmem [#allocation9], %s212
        // Predicated region
        $region41: #{tpu_custom_call.1} parent=31 // pred_check
          %p214 = pneg %p104
        $region42: #{tpu_custom_call.1} parent=31 // pred_check_branch
          %216 = sbr.rel (%p214) target = $region44
        $region43: #{tpu_custom_call.1} parent=31 // pred_region
          %217 = dma.done %s210, 128
        $region44: #{tpu_custom_call.1} parent=31 // pred_fallthru
          _
        %218 = sfence
        %p219 = pneg %p57
        %p220 = pneg %p54
        %p221 = pneg %p78
        %p222 = pneg %p75
        %s223 = sand.u32 %s91, 1
        %s224 = scalar_lea.sflag [#allocation10], %s223
        %s225 = sand.u32 %s91, 1
        %s226 = smul.addr %s225, 8
        %s227 = scalar_lea.vmem [#allocation9], %s226
        %p228 = pneg %p104
        %p229 = pneg %p101
        %p230 = pneg %p134
        %p231 = pneg %p131
        %s232 = sand.u32 %s121, 1
        %s233 = scalar_lea.sflag [#allocation6], %s232
        %s234 = sand.u32 %s121, 1
        %s235 = smul.addr %s234, 8
        %s236 = scalar_lea.vmem [#allocation11], %s235
        %s237 = sadd.s32 %s28, %s29
        %p238 = scmp.eq.s32.totalorder %s29, 0
        // Predicated region
        $region45: #{tpu_custom_call.1} parent=31 // pred_check
          %p239 = pneg %p238
        $region46: #{tpu_custom_call.1} parent=31 // pred_check_branch
          %241 = sbr.rel (%p239) target = $region48
        $region47: #{tpu_custom_call.1} parent=31 // pred_region
          %v242 = vld [vmem:[%s213] sm:$0xff]
          %v244 = vcombine.high %v242, %v242
          %vm246 = vcmask 1043456
          %v247 = vsel %vm246, %v242, -inf
          %v248 = vrot.slane %v247, 4
          %v249 = vmax.f32 %v247, %v248
          %v250 = vrot.slane %v249, 2
          %v251 = vmax.f32 %v249, %v250
          %v252 = vrot.slane %v251, 1
          %v253 = vmax.f32 %v251, %v252
          %v254 = vsel %vm246, %v244, -inf
          %v255 = vrot.slane %v254, 4
          %v256 = vmax.f32 %v254, %v255
          %v257 = vrot.slane %v256, 2
          %v258 = vmax.f32 %v256, %v257
          %v259 = vrot.slane %v258, 1
          %v260 = vmax.f32 %v258, %v259
          %v261 = vsel %vm246, %v242, 0.0
          %v262 = vrot.slane %v261, 4
          %v263 = vadd.f32 %v261, %v262
          %v264 = vrot.slane %v263, 2
          %v265 = vadd.f32 %v263, %v264
          %v266 = vrot.slane %v265, 1
          %v267 = vadd.f32 %v265, %v266
          %v268 = vsel %vm246, %v244, 0.0
          %v269 = vrot.slane %v268, 4
          %v270 = vadd.f32 %v268, %v269
          %v271 = vrot.slane %v270, 2
          %v272 = vadd.f32 %v270, %v271
          %v273 = vrot.slane %v272, 1
          %v274 = vadd.f32 %v272, %v273
          %v275 = vmul.f32 %v267, 0.25
          %v276 = vmul.f32 %v274, 0.25
          %277 = vst [vmem:[#allocation2] sm:$0x3] 0.0
          %278 = vst [vmem:[#allocation2 + $0x6] sm:$0x3] 0.0
          %v281 = vcombine.low %v253, %v260
          %v283 = vunpack.c.l.s4 1966171168
          %v284 = vunpack.c.0.s8 %v283
          %v285 = vlaneseq
          %v286 = vshrl.u32 %v285, 7
          %v287 = vsub.s32 %v284, %v286
          %v288 = vrot.slane %v281, %v287
          %v290 = vunpack.c.l.s4 1966171168
          %v291 = vunpack.c.0.s8 %v290
          %v292 = vlaneseq
          %v293 = vshrl.u32 %v292, 7
          %v294 = vsub.s32 %v291, %v293
          %v295 = vrot.slane %v288, %v294
          %v297 = vlaneseq
          %vm298 = vcmp.ge.s32.totalorder %v297, 0
          %vm299 = vcmp.lt.s32.totalorder %v297, 256
          %vm300 = vmand %vm298, %vm299
          %s301 = scalar_lea.vmem [#allocation2], 2
          %302 = vst.msk [vmem:[%s301] ss:$2 sm:$0x3] %vm300, %v295
          %v305 = vcombine.low %v275, %v276
          %v307 = vunpack.c.l.s4 1966171168
          %v308 = vunpack.c.0.s8 %v307
          %v309 = vlaneseq
          %v310 = vshrl.u32 %v309, 7
          %v311 = vsub.s32 %v308, %v310
          %v312 = vrot.slane %v305, %v311
          %v314 = vunpack.c.l.s4 1966171168
          %v315 = vunpack.c.0.s8 %v314
          %v316 = vlaneseq
          %v317 = vshrl.u32 %v316, 7
          %v318 = vsub.s32 %v315, %v317
          %v319 = vrot.slane %v312, %v318
          %s321 = scalar_lea.vmem [#allocation2], 3
          %322 = vst.msk [vmem:[%s321] ss:$2 sm:$0x3] %vm300, %v319
          %v323 = vlaneseq
          %v324 = vand.u32 %v323, 127
          %v325 = vadd.s32 %v324, 128
          %vm326 = vcmp.lt.s32.totalorder %v324, 0
          %v327 = vsub.s32 0, %v324
          %v328 = vsel %vm326, %v327, %v324
          %v329 = vshrl.u32 %v328, 4
          %v330 = vand.u32 %v328, 15
          %v331 = vsub.s32 0, %v330
          %v332 = vsel %vm326, %v331, %v330
          %vm333 = vcmp.lt.s32.totalorder %v325, 0
          %v334 = vsub.s32 0, %v325
          %v335 = vsel %vm333, %v334, %v325
          %v336 = vshrl.u32 %v335, 4
          %v337 = vand.u32 %v335, 15
          %v338 = vsub.s32 0, %v337
          %v339 = vsel %vm333, %v338, %v337
          %vm340 = vcmp.ne.s32.totalorder %v332, 0
          %vm341 = vcmp.ne.s32.totalorder %v339, 0
          %vm342 = vcmp.lt.s32.totalorder %v332, 0
          %vm343 = vcmp.lt.s32.totalorder %v339, 0
          %vm344 = vmand %vm342, %vm340
          %vm345 = vmand %vm343, %vm341
          %v346 = vadd.s32 %v332, 16
          %v347 = vadd.s32 %v339, 16
          %v348 = vsel %vm344, %v346, %v332
          %v349 = vsel %vm345, %v347, %v339
          %v350 = vld [vmem:[#allocation4] sm:$0x3]
          %v351 = vld [vmem:[#allocation2] sm:$0x3f]
          %353 = vset.pattern.permute.xlu0 0
          %354 = vperm.xlu0 %353, %v350
          %v355 = vpop.permute.xlu0 %354
          %v358 = vcombine.high %v351, %v351
          %v360 = vunpack.c.l.s4 1983009808
          %v361 = vunpack.c.0.s8 %v360
          %v362 = vlaneseq
          %v363 = vshrl.u32 %v362, 7
          %v364 = vsub.s32 %v361, %v363
          %v365 = vrot.slane %v351, %v364
          %v367 = vunpack.c.l.s4 1983009808
          %v368 = vunpack.c.0.s8 %v367
          %v369 = vlaneseq
          %v370 = vshrl.u32 %v369, 7
          %v371 = vsub.s32 %v368, %v370
          %v372 = vrot.slane %v358, %v371
          %v373 = vcombine.high %v365, %v365
          %374 = vrot.lane.b32.xlu0 %v365, 51
          %v375 = vpop.permute.xlu0 %374
          %376 = vrot.lane.b32.xlu0 %v373, 51
          %v377 = vpop.permute.xlu0 %376
          %378 = vrot.lane.b32.xlu0 %v372, 51
          %v379 = vpop.permute.xlu0 %378
          %vm380 = vcmask 416768
          %v381 = vsel %vm380, %v375, %v377
          %v382 = vsel %vm380, %v377, %v379
          %v385 = vmul.f32 %v355, %v381
          %v386 = vmul.f32 %v355, %v382
          %v387 = vadd.f32 %v385, 0.0
          %v388 = vadd.f32 %v386, 0.0
          %v389 = vld [vmem:[#allocation4] sm:$0x3]
          %v390 = vld [vmem:[#allocation2] sm:$0x3f]
          %392 = vset.pattern.permute.xlu0 7
          %393 = vperm.xlu0 %392, %v389
          %v394 = vpop.permute.xlu0 %393
          %v397 = vcombine.high %v390, %v390
          %v399 = vunpack.c.l.s4 1983009808
          %v400 = vunpack.c.0.s8 %v399
          %v401 = vlaneseq
          %v402 = vshrl.u32 %v401, 7
          %v403 = vsub.s32 %v400, %v402
          %v404 = vrot.slane %v390, %v403
          %v406 = vunpack.c.l.s4 1983009808
          %v407 = vunpack.c.0.s8 %v406
          %v408 = vlaneseq
          %v409 = vshrl.u32 %v408, 7
          %v410 = vsub.s32 %v407, %v409
          %v411 = vrot.slane %v397, %v410
          %v412 = vcombine.high %v404, %v404
          %413 = vrot.lane.b32.xlu0 %v404, 35
          %v414 = vpop.permute.xlu0 %413
          %415 = vrot.lane.b32.xlu0 %v412, 35
          %v416 = vpop.permute.xlu0 %415
          %417 = vrot.lane.b32.xlu0 %v411, 35
          %v418 = vpop.permute.xlu0 %417
          %vm419 = vcmask 285696
          %v420 = vsel %vm419, %v414, %v416
          %v421 = vsel %vm419, %v416, %v418
          %v424 = vmul.f32 %v394, %v420
          %v425 = vmul.f32 %v394, %v421
          %v426 = vadd.f32 %v387, %v424
          %v427 = vadd.f32 %v388, %v425
          %v428 = vld [vmem:[#allocation4] sm:$0x3]
          %v429 = vld [vmem:[#allocation2] sm:$0x3f]
          %431 = vset.pattern.permute.xlu0 14
          %432 = vperm.xlu0 %431, %v428
          %v433 = vpop.permute.xlu0 %432
          %v436 = vcombine.high %v429, %v429
          %v438 = vunpack.c.l.s4 1983009808
          %v439 = vunpack.c.0.s8 %v438
          %v440 = vlaneseq
          %v441 = vshrl.u32 %v440, 7
          %v442 = vsub.s32 %v439, %v441
          %v443 = vrot.slane %v429, %v442
          %v445 = vunpack.c.l.s4 1983009808
          %v446 = vunpack.c.0.s8 %v445
          %v447 = vlaneseq
          %v448 = vshrl.u32 %v447, 7
          %v449 = vsub.s32 %v446, %v448
          %v450 = vrot.slane %v436, %v449
          %v451 = vcombine.high %v443, %v443
          %452 = vrot.lane.b32.xlu0 %v443, 19
          %v453 = vpop.permute.xlu0 %452
          %454 = vrot.lane.b32.xlu0 %v451, 19
          %v455 = vpop.permute.xlu0 %454
          %456 = vrot.lane.b32.xlu0 %v450, 19
          %v457 = vpop.permute.xlu0 %456
          %vm458 = vcmask 154624
          %v459 = vsel %vm458, %v453, %v455
          %v460 = vsel %vm458, %v455, %v457
          %v463 = vmul.f32 %v433, %v459
          %v464 = vmul.f32 %v433, %v460
          %v465 = vadd.f32 %v426, %v463
          %v466 = vadd.f32 %v427, %v464
          %v467 = vld [vmem:[#allocation4] sm:$0x3]
          %v468 = vld [vmem:[#allocation2] sm:$0x3f]
          %470 = vset.pattern.permute.xlu0 21
          %471 = vperm.xlu0 %470, %v467
          %v472 = vpop.permute.xlu0 %471
          %v475 = vcombine.high %v468, %v468
          %v477 = vunpack.c.l.s4 1983009808
          %v478 = vunpack.c.0.s8 %v477
          %v479 = vlaneseq
          %v480 = vshrl.u32 %v479, 7
          %v481 = vsub.s32 %v478, %v480
          %v482 = vrot.slane %v468, %v481
          %v484 = vunpack.c.l.s4 1983009808
          %v485 = vunpack.c.0.s8 %v484
          %v486 = vlaneseq
          %v487 = vshrl.u32 %v486, 7
          %v488 = vsub.s32 %v485, %v487
          %v489 = vrot.slane %v475, %v488
          %v490 = vcombine.high %v482, %v482
          %491 = vrot.lane.b32.xlu0 %v482, 3
          %v492 = vpop.permute.xlu0 %491
          %493 = vrot.lane.b32.xlu0 %v490, 3
          %v494 = vpop.permute.xlu0 %493
          %495 = vrot.lane.b32.xlu0 %v489, 3
          %v496 = vpop.permute.xlu0 %495
          %vm497 = vcmask 23552
          %v498 = vsel %vm497, %v492, %v494
          %v499 = vsel %vm497, %v494, %v496
          %v502 = vmul.f32 %v472, %v498
          %v503 = vmul.f32 %v472, %v499
          %v504 = vadd.f32 %v465, %v502
          %v505 = vadd.f32 %v466, %v503
          %v506 = vld [vmem:[#allocation4] sm:$0x3]
          %v507 = vld [vmem:[#allocation2 + $0x2] sm:$0x3f]
          %509 = vset.pattern.permute.xlu0 28
          %510 = vperm.xlu0 %509, %v506
          %v511 = vpop.permute.xlu0 %510
          %v514 = vcombine.high %v507, %v507
          %v516 = vunpack.c.l.s4 1983009808
          %v517 = vunpack.c.0.s8 %v516
          %v518 = vlaneseq
          %v519 = vshrl.u32 %v518, 7
          %v520 = vsub.s32 %v517, %v519
          %v521 = vrot.slane %v507, %v520
          %v523 = vunpack.c.l.s4 1983009808
          %v524 = vunpack.c.0.s8 %v523
          %v525 = vlaneseq
          %v526 = vshrl.u32 %v525, 7
          %v527 = vsub.s32 %v524, %v526
          %v528 = vrot.slane %v514, %v527
          %v529 = vcombine.high %v521, %v521
          %530 = vrot.lane.b32.xlu0 %v521, 115
          %v531 = vpop.permute.xlu0 %530
          %532 = vrot.lane.b32.xlu0 %v529, 115
          %v533 = vpop.permute.xlu0 %532
          %534 = vrot.lane.b32.xlu0 %v528, 115
          %v535 = vpop.permute.xlu0 %534
          %vm536 = vcmask 941056
          %v537 = vsel %vm536, %v531, %v533
          %v538 = vsel %vm536, %v533, %v535
          %v541 = vmul.f32 %v511, %v537
          %v542 = vmul.f32 %v511, %v538
          %v543 = vadd.f32 %v504, %v541
          %v544 = vadd.f32 %v505, %v542
          %v545 = vld [vmem:[#allocation4] sm:$0x3]
          %v546 = vld [vmem:[#allocation2 + $0x2] sm:$0x3f]
          %548 = vset.pattern.permute.xlu0 35
          %549 = vperm.xlu0 %548, %v545
          %v550 = vpop.permute.xlu0 %549
          %v553 = vcombine.high %v546, %v546
          %v555 = vunpack.c.l.s4 1983009808
          %v556 = vunpack.c.0.s8 %v555
          %v557 = vlaneseq
          %v558 = vshrl.u32 %v557, 7
          %v559 = vsub.s32 %v556, %v558
          %v560 = vrot.slane %v546, %v559
          %v562 = vunpack.c.l.s4 1983009808
          %v563 = vunpack.c.0.s8 %v562
          %v564 = vlaneseq
          %v565 = vshrl.u32 %v564, 7
          %v566 = vsub.s32 %v563, %v565
          %v567 = vrot.slane %v553, %v566
          %v568 = vcombine.high %v560, %v560
          %569 = vrot.lane.b32.xlu0 %v560, 99
          %v570 = vpop.permute.xlu0 %569
          %571 = vrot.lane.b32.xlu0 %v568, 99
          %v572 = vpop.permute.xlu0 %571
          %573 = vrot.lane.b32.xlu0 %v567, 99
          %v574 = vpop.permute.xlu0 %573
          %vm575 = vcmask 809984
          %v576 = vsel %vm575, %v570, %v572
          %v577 = vsel %vm575, %v572, %v574
          %v580 = vmul.f32 %v550, %v576
          %v581 = vmul.f32 %v550, %v577
          %v582 = vadd.f32 %v543, %v580
          %v583 = vadd.f32 %v544, %v581
          %v584 = vld [vmem:[#allocation4] sm:$0x3]
          %v585 = vld [vmem:[#allocation2 + $0x2] sm:$0x3f]
          %587 = vset.pattern.permute.xlu0 42
          %588 = vperm.xlu0 %587, %v584
          %v589 = vpop.permute.xlu0 %588
          %v592 = vcombine.high %v585, %v585
          %v594 = vunpack.c.l.s4 1983009808
          %v595 = vunpack.c.0.s8 %v594
          %v596 = vlaneseq
          %v597 = vshrl.u32 %v596, 7
          %v598 = vsub.s32 %v595, %v597
          %v599 = vrot.slane %v585, %v598
          %v601 = vunpack.c.l.s4 1983009808
          %v602 = vunpack.c.0.s8 %v601
          %v603 = vlaneseq
          %v604 = vshrl.u32 %v603, 7
          %v605 = vsub.s32 %v602, %v604
          %v606 = vrot.slane %v592, %v605
          %v607 = vcombine.high %v599, %v599
          %608 = vrot.lane.b32.xlu0 %v599, 83
          %v609 = vpop.permute.xlu0 %608
          %610 = vrot.lane.b32.xlu0 %v607, 83
          %v611 = vpop.permute.xlu0 %610
          %612 = vrot.lane.b32.xlu0 %v606, 83
          %v613 = vpop.permute.xlu0 %612
          %vm614 = vcmask 678912
          %v615 = vsel %vm614, %v609, %v611
          %v616 = vsel %vm614, %v611, %v613
          %v619 = vmul.f32 %v589, %v615
          %v620 = vmul.f32 %v589, %v616
          %v621 = vadd.f32 %v582, %v619
          %v622 = vadd.f32 %v583, %v620
          %v623 = vadd.s32 %v348, 4294967293
          %v624 = vadd.s32 %v349, 4294967293
          %vm625 = vcmp.ge.s32.totalorder %v623, 0
          %vm626 = vcmp.ge.s32.totalorder %v624, 0
          %vm627 = vcmp.lt.s32.totalorder %v623, 16
          %vm628 = vcmp.lt.s32.totalorder %v624, 16
          %vm629 = vmand %vm625, %vm627
          %vm630 = vmand %vm626, %vm628
          %v631 = vsel %vm629, 1, 0
          %v632 = vsel %vm630, 1, 0
          %vm633 = vcmp.eq.s32.totalorder %v631, 1
          %vm634 = vcmp.eq.s32.totalorder %v632, 1
          %v635 = vsel %vm633, %v621, 0.0
          %v636 = vsel %vm634, %v622, 0.0
          %v637 = vadd.f32 %v635, 0.0
          %v638 = vadd.f32 %v636, 0.0
          %v639 = vld [vmem:[#allocation4] sm:$0x3]
          %v640 = vld [vmem:[#allocation2] sm:$0x3f]
          %642 = vset.pattern.permute.xlu0 1
          %643 = vperm.xlu0 %642, %v639
          %v644 = vpop.permute.xlu0 %643
          %v647 = vcombine.high %v640, %v640
          %v649 = vunpack.c.l.s4 1983009808
          %v650 = vunpack.c.0.s8 %v649
          %v651 = vlaneseq
          %v652 = vshrl.u32 %v651, 7
          %v653 = vsub.s32 %v650, %v652
          %v654 = vrot.slane %v640, %v653
          %v656 = vunpack.c.l.s4 1983009808
          %v657 = vunpack.c.0.s8 %v656
          %v658 = vlaneseq
          %v659 = vshrl.u32 %v658, 7
          %v660 = vsub.s32 %v657, %v659
          %v661 = vrot.slane %v647, %v660
          %v662 = vcombine.high %v654, %v654
          %663 = vrot.lane.b32.xlu0 %v654, 50
          %v664 = vpop.permute.xlu0 %663
          %665 = vrot.lane.b32.xlu0 %v662, 50
          %v666 = vpop.permute.xlu0 %665
          %667 = vrot.lane.b32.xlu0 %v661, 50
          %v668 = vpop.permute.xlu0 %667
          %vm669 = vcmask 408576
          %v670 = vsel %vm669, %v664, %v666
          %v671 = vsel %vm669, %v666, %v668
          %v674 = vmul.f32 %v644, %v670
          %v675 = vmul.f32 %v644, %v671
          %v676 = vadd.f32 %v674, 0.0
          %v677 = vadd.f32 %v675, 0.0
          %v678 = vld [vmem:[#allocation4] sm:$0x3]
          %v679 = vld [vmem:[#allocation2] sm:$0x3f]
          %681 = vset.pattern.permute.xlu0 8
          %682 = vperm.xlu0 %681, %v678
          %v683 = vpop.permute.xlu0 %682
          %v686 = vcombine.high %v679, %v679
          %v688 = vunpack.c.l.s4 1983009808
          %v689 = vunpack.c.0.s8 %v688
          %v690 = vlaneseq
          %v691 = vshrl.u32 %v690, 7
          %v692 = vsub.s32 %v689, %v691
          %v693 = vrot.slane %v679, %v692
          %v695 = vunpack.c.l.s4 1983009808
          %v696 = vunpack.c.0.s8 %v695
          %v697 = vlaneseq
          %v698 = vshrl.u32 %v697, 7
          %v699 = vsub.s32 %v696, %v698
          %v700 = vrot.slane %v686, %v699
          %v701 = vcombine.high %v693, %v693
          %702 = vrot.lane.b32.xlu0 %v693, 34
          %v703 = vpop.permute.xlu0 %702
          %704 = vrot.lane.b32.xlu0 %v701, 34
          %v705 = vpop.permute.xlu0 %704
          %706 = vrot.lane.b32.xlu0 %v700, 34
          %v707 = vpop.permute.xlu0 %706
          %vm708 = vcmask 277504
          %v709 = vsel %vm708, %v703, %v705
          %v710 = vsel %vm708, %v705, %v707
          %v713 = vmul.f32 %v683, %v709
          %v714 = vmul.f32 %v683, %v710
          %v715 = vadd.f32 %v676, %v713
          %v716 = vadd.f32 %v677, %v714
          %v717 = vld [vmem:[#allocation4] sm:$0x3]
          %v718 = vld [vmem:[#allocation2] sm:$0x3f]
          %720 = vset.pattern.permute.xlu0 15
          %721 = vperm.xlu0 %720, %v717
          %v722 = vpop.permute.xlu0 %721
          %v725 = vcombine.high %v718, %v718
          %v727 = vunpack.c.l.s4 1983009808
          %v728 = vunpack.c.0.s8 %v727
          %v729 = vlaneseq
          %v730 = vshrl.u32 %v729, 7
          %v731 = vsub.s32 %v728, %v730
          %v732 = vrot.slane %v718, %v731
          %v734 = vunpack.c.l.s4 1983009808
          %v735 = vunpack.c.0.s8 %v734
          %v736 = vlaneseq
          %v737 = vshrl.u32 %v736, 7
          %v738 = vsub.s32 %v735, %v737
          %v739 = vrot.slane %v725, %v738
          %v740 = vcombine.high %v732, %v732
          %741 = vrot.lane.b32.xlu0 %v732, 18
          %v742 = vpop.permute.xlu0 %741
          %743 = vrot.lane.b32.xlu0 %v740, 18
          %v744 = vpop.permute.xlu0 %743
          %745 = vrot.lane.b32.xlu0 %v739, 18
          %v746 = vpop.permute.xlu0 %745
          %vm747 = vcmask 146432
          %v748 = vsel %vm747, %v742, %v744
          %v749 = vsel %vm747, %v744, %v746
          %v752 = vmul.f32 %v722, %v748
          %v753 = vmul.f32 %v722, %v749
          %v754 = vadd.f32 %v715, %v752
          %v755 = vadd.f32 %v716, %v753
          %v756 = vld [vmem:[#allocation4] sm:$0x3]
          %v757 = vld [vmem:[#allocation2] sm:$0x3f]
          %759 = vset.pattern.permute.xlu0 22
          %760 = vperm.xlu0 %759, %v756
          %v761 = vpop.permute.xlu0 %760
          %v764 = vcombine.high %v757, %v757
          %v766 = vunpack.c.l.s4 1983009808
          %v767 = vunpack.c.0.s8 %v766
          %v768 = vlaneseq
          %v769 = vshrl.u32 %v768, 7
          %v770 = vsub.s32 %v767, %v769
          %v771 = vrot.slane %v757, %v770
          %v773 = vunpack.c.l.s4 1983009808
          %v774 = vunpack.c.0.s8 %v773
          %v775 = vlaneseq
          %v776 = vshrl.u32 %v775, 7
          %v777 = vsub.s32 %v774, %v776
          %v778 = vrot.slane %v764, %v777
          %v779 = vcombine.high %v771, %v771
          %780 = vrot.lane.b32.xlu0 %v771, 2
          %v781 = vpop.permute.xlu0 %780
          %782 = vrot.lane.b32.xlu0 %v779, 2
          %v783 = vpop.permute.xlu0 %782
          %784 = vrot.lane.b32.xlu0 %v778, 2
          %v785 = vpop.permute.xlu0 %784
          %vm786 = vcmask 15360
          %v787 = vsel %vm786, %v781, %v783
          %v788 = vsel %vm786, %v783, %v785
          %v791 = vmul.f32 %v761, %v787
          %v792 = vmul.f32 %v761, %v788
          %v793 = vadd.f32 %v754, %v791
          %v794 = vadd.f32 %v755, %v792
          %v795 = vld [vmem:[#allocation4] sm:$0x3]
          %v796 = vld [vmem:[#allocation2 + $0x2] sm:$0x3f]
          %798 = vset.pattern.permute.xlu0 29
          %799 = vperm.xlu0 %798, %v795
          %v800 = vpop.permute.xlu0 %799
          %v803 = vcombine.high %v796, %v796
          %v805 = vunpack.c.l.s4 1983009808
          %v806 = vunpack.c.0.s8 %v805
          %v807 = vlaneseq
          %v808 = vshrl.u32 %v807, 7
          %v809 = vsub.s32 %v806, %v808
          %v810 = vrot.slane %v796, %v809
          %v812 = vunpack.c.l.s4 1983009808
          %v813 = vunpack.c.0.s8 %v812
          %v814 = vlaneseq
          %v815 = vshrl.u32 %v814, 7
          %v816 = vsub.s32 %v813, %v815
          %v817 = vrot.slane %v803, %v816
          %v818 = vcombine.high %v810, %v810
          %819 = vrot.lane.b32.xlu0 %v810, 114
          %v820 = vpop.permute.xlu0 %819
          %821 = vrot.lane.b32.xlu0 %v818, 114
          %v822 = vpop.permute.xlu0 %821
          %823 = vrot.lane.b32.xlu0 %v817, 114
          %v824 = vpop.permute.xlu0 %823
          %vm825 = vcmask 932864
          %v826 = vsel %vm825, %v820, %v822
          %v827 = vsel %vm825, %v822, %v824
          %v830 = vmul.f32 %v800, %v826
          %v831 = vmul.f32 %v800, %v827
          %v832 = vadd.f32 %v793, %v830
          %v833 = vadd.f32 %v794, %v831
          %v834 = vld [vmem:[#allocation4] sm:$0x3]
          %v835 = vld [vmem:[#allocation2 + $0x2] sm:$0x3f]
          %837 = vset.pattern.permute.xlu0 36
          %838 = vperm.xlu0 %837, %v834
          %v839 = vpop.permute.xlu0 %838
          %v842 = vcombine.high %v835, %v835
          %v844 = vunpack.c.l.s4 1983009808
          %v845 = vunpack.c.0.s8 %v844
          %v846 = vlaneseq
          %v847 = vshrl.u32 %v846, 7
          %v848 = vsub.s32 %v845, %v847
          %v849 = vrot.slane %v835, %v848
          %v851 = vunpack.c.l.s4 1983009808
          %v852 = vunpack.c.0.s8 %v851
          %v853 = vlaneseq
          %v854 = vshrl.u32 %v853, 7
          %v855 = vsub.s32 %v852, %v854
          %v856 = vrot.slane %v842, %v855
          %v857 = vcombine.high %v849, %v849
          %858 = vrot.lane.b32.xlu0 %v849, 98
          %v859 = vpop.permute.xlu0 %858
          %860 = vrot.lane.b32.xlu0 %v857, 98
          %v861 = vpop.permute.xlu0 %860
          %862 = vrot.lane.b32.xlu0 %v856, 98
          %v863 = vpop.permute.xlu0 %862
          %vm864 = vcmask 801792
          %v865 = vsel %vm864, %v859, %v861
          %v866 = vsel %vm864, %v861, %v863
          %v869 = vmul.f32 %v839, %v865
          %v870 = vmul.f32 %v839, %v866
          %v871 = vadd.f32 %v832, %v869
          %v872 = vadd.f32 %v833, %v870
          %v873 = vld [vmem:[#allocation4] sm:$0x3]
          %v874 = vld [vmem:[#allocation2 + $0x2] sm:$0x3f]
          %876 = vset.pattern.permute.xlu0 43
          %877 = vperm.xlu0 %876, %v873
          %v878 = vpop.permute.xlu0 %877
          %v881 = vcombine.high %v874, %v874
          %v883 = vunpack.c.l.s4 1983009808
          %v884 = vunpack.c.0.s8 %v883
          %v885 = vlaneseq
          %v886 = vshrl.u32 %v885, 7
          %v887 = vsub.s32 %v884, %v886
          %v888 = vrot.slane %v874, %v887
          %v890 = vunpack.c.l.s4 1983009808
          %v891 = vunpack.c.0.s8 %v890
          %v892 = vlaneseq
          %v893 = vshrl.u32 %v892, 7
          %v894 = vsub.s32 %v891, %v893
          %v895 = vrot.slane %v881, %v894
          %v896 = vcombine.high %v888, %v888
          %897 = vrot.lane.b32.xlu0 %v888, 82
          %v898 = vpop.permute.xlu0 %897
          %899 = vrot.lane.b32.xlu0 %v896, 82
          %v900 = vpop.permute.xlu0 %899
          %901 = vrot.lane.b32.xlu0 %v895, 82
          %v902 = vpop.permute.xlu0 %901
          %vm903 = vcmask 670720
          %v904 = vsel %vm903, %v898, %v900
          %v905 = vsel %vm903, %v900, %v902
          %v908 = vmul.f32 %v878, %v904
          %v909 = vmul.f32 %v878, %v905
          %v910 = vadd.f32 %v871, %v908
          %v911 = vadd.f32 %v872, %v909
          %v912 = vadd.s32 %v348, 4294967294
          %v913 = vadd.s32 %v349, 4294967294
          %vm914 = vcmp.ge.s32.totalorder %v912, 0
          %vm915 = vcmp.ge.s32.totalorder %v913, 0
          %vm916 = vcmp.lt.s32.totalorder %v912, 16
          %vm917 = vcmp.lt.s32.totalorder %v913, 16
          %vm918 = vmand %vm914, %vm916
          %vm919 = vmand %vm915, %vm917
          %v920 = vsel %vm918, 1, 0
          %v921 = vsel %vm919, 1, 0
          %vm922 = vcmp.eq.s32.totalorder %v920, 1
          %vm923 = vcmp.eq.s32.totalorder %v921, 1
          %v924 = vsel %vm922, %v910, 0.0
          %v925 = vsel %vm923, %v911, 0.0
          %v926 = vadd.f32 %v637, %v924
          %v927 = vadd.f32 %v638, %v925
          %v928 = vld [vmem:[#allocation4] sm:$0x3]
          %v929 = vld [vmem:[#allocation2] sm:$0x3f]
          %931 = vset.pattern.permute.xlu0 2
          %932 = vperm.xlu0 %931, %v928
          %v933 = vpop.permute.xlu0 %932
          %v936 = vcombine.high %v929, %v929
          %v938 = vunpack.c.l.s4 1983009808
          %v939 = vunpack.c.0.s8 %v938
          %v940 = vlaneseq
          %v941 = vshrl.u32 %v940, 7
          %v942 = vsub.s32 %v939, %v941
          %v943 = vrot.slane %v929, %v942
          %v945 = vunpack.c.l.s4 1983009808
          %v946 = vunpack.c.0.s8 %v945
          %v947 = vlaneseq
          %v948 = vshrl.u32 %v947, 7
          %v949 = vsub.s32 %v946, %v948
          %v950 = vrot.slane %v936, %v949
          %v951 = vcombine.high %v943, %v943
          %952 = vrot.lane.b32.xlu0 %v943, 49
          %v953 = vpop.permute.xlu0 %952
          %954 = vrot.lane.b32.xlu0 %v951, 49
          %v955 = vpop.permute.xlu0 %954
          %956 = vrot.lane.b32.xlu0 %v950, 49
          %v957 = vpop.permute.xlu0 %956
          %vm958 = vcmask 400384
          %v959 = vsel %vm958, %v953, %v955
          %v960 = vsel %vm958, %v955, %v957
          %v963 = vmul.f32 %v933, %v959
          %v964 = vmul.f32 %v933, %v960
          %v965 = vadd.f32 %v963, 0.0
          %v966 = vadd.f32 %v964, 0.0
          %v967 = vld [vmem:[#allocation4] sm:$0x3]
          %v968 = vld [vmem:[#allocation2] sm:$0x3f]
          %970 = vset.pattern.permute.xlu0 9
          %971 = vperm.xlu0 %970, %v967
          %v972 = vpop.permute.xlu0 %971
          %v975 = vcombine.high %v968, %v968
          %v977 = vunpack.c.l.s4 1983009808
          %v978 = vunpack.c.0.s8 %v977
          %v979 = vlaneseq
          %v980 = vshrl.u32 %v979, 7
          %v981 = vsub.s32 %v978, %v980
          %v982 = vrot.slane %v968, %v981
          %v984 = vunpack.c.l.s4 1983009808
          %v985 = vunpack.c.0.s8 %v984
          %v986 = vlaneseq
          %v987 = vshrl.u32 %v986, 7
          %v988 = vsub.s32 %v985, %v987
          %v989 = vrot.slane %v975, %v988
          %v990 = vcombine.high %v982, %v982
          %991 = vrot.lane.b32.xlu0 %v982, 33
          %v992 = vpop.permute.xlu0 %991
          %993 = vrot.lane.b32.xlu0 %v990, 33
          %v994 = vpop.permute.xlu0 %993
          %995 = vrot.lane.b32.xlu0 %v989, 33
          %v996 = vpop.permute.xlu0 %995
          %vm997 = vcmask 269312
          %v998 = vsel %vm997, %v992, %v994
          %v999 = vsel %vm997, %v994, %v996
          %v1002 = vmul.f32 %v972, %v998
          %v1003 = vmul.f32 %v972, %v999
          %v1004 = vadd.f32 %v965, %v1002
          %v1005 = vadd.f32 %v966, %v1003
          %v1006 = vld [vmem:[#allocation4] sm:$0x3]
          %v1007 = vld [vmem:[#allocation2] sm:$0x3f]
          %1009 = vset.pattern.permute.xlu0 16
          %1010 = vperm.xlu0 %1009, %v1006
          %v1011 = vpop.permute.xlu0 %1010
          %v1014 = vcombine.high %v1007, %v1007
          %v1016 = vunpack.c.l.s4 1983009808
          %v1017 = vunpack.c.0.s8 %v1016
          %v1018 = vlaneseq
          %v1019 = vshrl.u32 %v1018, 7
          %v1020 = vsub.s32 %v1017, %v1019
          %v1021 = vrot.slane %v1007, %v1020
          %v1023 = vunpack.c.l.s4 1983009808
          %v1024 = vunpack.c.0.s8 %v1023
          %v1025 = vlaneseq
          %v1026 = vshrl.u32 %v1025, 7
          %v1027 = vsub.s32 %v1024, %v1026
          %v1028 = vrot.slane %v1014, %v1027
          %v1029 = vcombine.high %v1021, %v1021
          %1030 = vrot.lane.b32.xlu0 %v1021, 17
          %v1031 = vpop.permute.xlu0 %1030
          %1032 = vrot.lane.b32.xlu0 %v1029, 17
          %v1033 = vpop.permute.xlu0 %1032
          %1034 = vrot.lane.b32.xlu0 %v1028, 17
          %v1035 = vpop.permute.xlu0 %1034
          %vm1036 = vcmask 138240
          %v1037 = vsel %vm1036, %v1031, %v1033
          %v1038 = vsel %vm1036, %v1033, %v1035
          %v1041 = vmul.f32 %v1011, %v1037
          %v1042 = vmul.f32 %v1011, %v1038
          %v1043 = vadd.f32 %v1004, %v1041
          %v1044 = vadd.f32 %v1005, %v1042
          %v1045 = vld [vmem:[#allocation4] sm:$0x3]
          %v1046 = vld [vmem:[#allocation2] sm:$0x3f]
          %1048 = vset.pattern.permute.xlu0 23
          %1049 = vperm.xlu0 %1048, %v1045
          %v1050 = vpop.permute.xlu0 %1049
          %v1053 = vcombine.high %v1046, %v1046
          %v1055 = vunpack.c.l.s4 1983009808
          %v1056 = vunpack.c.0.s8 %v1055
          %v1057 = vlaneseq
          %v1058 = vshrl.u32 %v1057, 7
          %v1059 = vsub.s32 %v1056, %v1058
          %v1060 = vrot.slane %v1046, %v1059
          %v1062 = vunpack.c.l.s4 1983009808
          %v1063 = vunpack.c.0.s8 %v1062
          %v1064 = vlaneseq
          %v1065 = vshrl.u32 %v1064, 7
          %v1066 = vsub.s32 %v1063, %v1065
          %v1067 = vrot.slane %v1053, %v1066
          %v1068 = vcombine.high %v1060, %v1060
          %1069 = vrot.lane.b32.xlu0 %v1060, 1
          %v1070 = vpop.permute.xlu0 %1069
          %1071 = vrot.lane.b32.xlu0 %v1068, 1
          %v1072 = vpop.permute.xlu0 %1071
          %1073 = vrot.lane.b32.xlu0 %v1067, 1
          %v1074 = vpop.permute.xlu0 %1073
          %vm1075 = vcmask 7168
          %v1076 = vsel %vm1075, %v1070, %v1072
          %v1077 = vsel %vm1075, %v1072, %v1074
          %v1080 = vmul.f32 %v1050, %v1076
          %v1081 = vmul.f32 %v1050, %v1077
          %v1082 = vadd.f32 %v1043, %v1080
          %v1083 = vadd.f32 %v1044, %v1081
          %v1084 = vld [vmem:[#allocation4] sm:$0x3]
          %v1085 = vld [vmem:[#allocation2 + $0x2] sm:$0x3f]
          %1087 = vset.pattern.permute.xlu0 30
          %1088 = vperm.xlu0 %1087, %v1084
          %v1089 = vpop.permute.xlu0 %1088
          %v1092 = vcombine.high %v1085, %v1085
          %v1094 = vunpack.c.l.s4 1983009808
          %v1095 = vunpack.c.0.s8 %v1094
          %v1096 = vlaneseq
          %v1097 = vshrl.u32 %v1096, 7
          %v1098 = vsub.s32 %v1095, %v1097
          %v1099 = vrot.slane %v1085, %v1098
          %v1101 = vunpack.c.l.s4 1983009808
          %v1102 = vunpack.c.0.s8 %v1101
          %v1103 = vlaneseq
          %v1104 = vshrl.u32 %v1103, 7
          %v1105 = vsub.s32 %v1102, %v1104
          %v1106 = vrot.slane %v1092, %v1105
          %v1107 = vcombine.high %v1099, %v1099
          %1108 = vrot.lane.b32.xlu0 %v1099, 113
          %v1109 = vpop.permute.xlu0 %1108
          %1110 = vrot.lane.b32.xlu0 %v1107, 113
          %v1111 = vpop.permute.xlu0 %1110
          %1112 = vrot.lane.b32.xlu0 %v1106, 113
          %v1113 = vpop.permute.xlu0 %1112
          %vm1114 = vcmask 924672
          %v1115 = vsel %vm1114, %v1109, %v1111
          %v1116 = vsel %vm1114, %v1111, %v1113
          %v1119 = vmul.f32 %v1089, %v1115
          %v1120 = vmul.f32 %v1089, %v1116
          %v1121 = vadd.f32 %v1082, %v1119
          %v1122 = vadd.f32 %v1083, %v1120
          %v1123 = vld [vmem:[#allocation4] sm:$0x3]
          %v1124 = vld [vmem:[#allocation2 + $0x2] sm:$0x3f]
          %1126 = vset.pattern.permute.xlu0 37
          %1127 = vperm.xlu0 %1126, %v1123
          %v1128 = vpop.permute.xlu0 %1127
          %v1131 = vcombine.high %v1124, %v1124
          %v1133 = vunpack.c.l.s4 1983009808
          %v1134 = vunpack.c.0.s8 %v1133
          %v1135 = vlaneseq
          %v1136 = vshrl.u32 %v1135, 7
          %v1137 = vsub.s32 %v1134, %v1136
          %v1138 = vrot.slane %v1124, %v1137
          %v1140 = vunpack.c.l.s4 1983009808
          %v1141 = vunpack.c.0.s8 %v1140
          %v1142 = vlaneseq
          %v1143 = vshrl.u32 %v1142, 7
          %v1144 = vsub.s32 %v1141, %v1143
          %v1145 = vrot.slane %v1131, %v1144
          %v1146 = vcombine.high %v1138, %v1138
          %1147 = vrot.lane.b32.xlu0 %v1138, 97
          %v1148 = vpop.permute.xlu0 %1147
          %1149 = vrot.lane.b32.xlu0 %v1146, 97
          %v1150 = vpop.permute.xlu0 %1149
          %1151 = vrot.lane.b32.xlu0 %v1145, 97
          %v1152 = vpop.permute.xlu0 %1151
          %vm1153 = vcmask 793600
          %v1154 = vsel %vm1153, %v1148, %v1150
          %v1155 = vsel %vm1153, %v1150, %v1152
          %v1158 = vmul.f32 %v1128, %v1154
          %v1159 = vmul.f32 %v1128, %v1155
          %v1160 = vadd.f32 %v1121, %v1158
          %v1161 = vadd.f32 %v1122, %v1159
          %v1162 = vld [vmem:[#allocation4] sm:$0x3]
          %v1163 = vld [vmem:[#allocation2 + $0x2] sm:$0x3f]
          %1165 = vset.pattern.permute.xlu0 44
          %1166 = vperm.xlu0 %1165, %v1162
          %v1167 = vpop.permute.xlu0 %1166
          %v1170 = vcombine.high %v1163, %v1163
          %v1172 = vunpack.c.l.s4 1983009808
          %v1173 = vunpack.c.0.s8 %v1172
          %v1174 = vlaneseq
          %v1175 = vshrl.u32 %v1174, 7
          %v1176 = vsub.s32 %v1173, %v1175
          %v1177 = vrot.slane %v1163, %v1176
          %v1179 = vunpack.c.l.s4 1983009808
          %v1180 = vunpack.c.0.s8 %v1179
          %v1181 = vlaneseq
          %v1182 = vshrl.u32 %v1181, 7
          %v1183 = vsub.s32 %v1180, %v1182
          %v1184 = vrot.slane %v1170, %v1183
          %v1185 = vcombine.high %v1177, %v1177
          %1186 = vrot.lane.b32.xlu0 %v1177, 81
          %v1187 = vpop.permute.xlu0 %1186
          %1188 = vrot.lane.b32.xlu0 %v1185, 81
          %v1189 = vpop.permute.xlu0 %1188
          %1190 = vrot.lane.b32.xlu0 %v1184, 81
          %v1191 = vpop.permute.xlu0 %1190
          %vm1192 = vcmask 662528
          %v1193 = vsel %vm1192, %v1187, %v1189
          %v1194 = vsel %vm1192, %v1189, %v1191
          %v1197 = vmul.f32 %v1167, %v1193
          %v1198 = vmul.f32 %v1167, %v1194
          %v1199 = vadd.f32 %v1160, %v1197
          %v1200 = vadd.f32 %v1161, %v1198
          %v1201 = vadd.s32 %v348, 4294967295
          %v1202 = vadd.s32 %v349, 4294967295
          %vm1203 = vcmp.ge.s32.totalorder %v1201, 0
          %vm1204 = vcmp.ge.s32.totalorder %v1202, 0
          %vm1205 = vcmp.lt.s32.totalorder %v1201, 16
          %vm1206 = vcmp.lt.s32.totalorder %v1202, 16
          %vm1207 = vmand %vm1203, %vm1205
          %vm1208 = vmand %vm1204, %vm1206
          %v1209 = vsel %vm1207, 1, 0
          %v1210 = vsel %vm1208, 1, 0
          %vm1211 = vcmp.eq.s32.totalorder %v1209, 1
          %vm1212 = vcmp.eq.s32.totalorder %v1210, 1
          %v1213 = vsel %vm1211, %v1199, 0.0
          %v1214 = vsel %vm1212, %v1200, 0.0
          %v1215 = vadd.f32 %v926, %v1213
          %v1216 = vadd.f32 %v927, %v1214
          %v1217 = vld [vmem:[#allocation4] sm:$0x3]
          %v1218 = vld [vmem:[#allocation2] sm:$0x3f]
          %1220 = vset.pattern.permute.xlu0 3
          %1221 = vperm.xlu0 %1220, %v1217
          %v1222 = vpop.permute.xlu0 %1221
          %v1225 = vcombine.high %v1218, %v1218
          %v1227 = vunpack.c.l.s4 1983009808
          %v1228 = vunpack.c.0.s8 %v1227
          %v1229 = vlaneseq
          %v1230 = vshrl.u32 %v1229, 7
          %v1231 = vsub.s32 %v1228, %v1230
          %v1232 = vrot.slane %v1218, %v1231
          %v1234 = vunpack.c.l.s4 1983009808
          %v1235 = vunpack.c.0.s8 %v1234
          %v1236 = vlaneseq
          %v1237 = vshrl.u32 %v1236, 7
          %v1238 = vsub.s32 %v1235, %v1237
          %v1239 = vrot.slane %v1225, %v1238
          %v1240 = vcombine.high %v1232, %v1232
          %1241 = vrot.lane.b32.xlu0 %v1232, 48
          %v1242 = vpop.permute.xlu0 %1241
          %1243 = vrot.lane.b32.xlu0 %v1240, 48
          %v1244 = vpop.permute.xlu0 %1243
          %1245 = vrot.lane.b32.xlu0 %v1239, 48
          %v1246 = vpop.permute.xlu0 %1245
          %vm1247 = vcmask 392192
          %v1248 = vsel %vm1247, %v1242, %v1244
          %v1249 = vsel %vm1247, %v1244, %v1246
          %v1252 = vmul.f32 %v1222, %v1248
          %v1253 = vmul.f32 %v1222, %v1249
          %v1254 = vadd.f32 %v1252, 0.0
          %v1255 = vadd.f32 %v1253, 0.0
          %v1256 = vld [vmem:[#allocation4] sm:$0x3]
          %v1257 = vld [vmem:[#allocation2] sm:$0x3f]
          %1259 = vset.pattern.permute.xlu0 10
          %1260 = vperm.xlu0 %1259, %v1256
          %v1261 = vpop.permute.xlu0 %1260
          %v1264 = vcombine.high %v1257, %v1257
          %v1266 = vunpack.c.l.s4 1983009808
          %v1267 = vunpack.c.0.s8 %v1266
          %v1268 = vlaneseq
          %v1269 = vshrl.u32 %v1268, 7
          %v1270 = vsub.s32 %v1267, %v1269
          %v1271 = vrot.slane %v1257, %v1270
          %v1273 = vunpack.c.l.s4 1983009808
          %v1274 = vunpack.c.0.s8 %v1273
          %v1275 = vlaneseq
          %v1276 = vshrl.u32 %v1275, 7
          %v1277 = vsub.s32 %v1274, %v1276
          %v1278 = vrot.slane %v1264, %v1277
          %v1279 = vcombine.high %v1271, %v1271
          %1280 = vrot.lane.b32.xlu0 %v1271, 32
          %v1281 = vpop.permute.xlu0 %1280
          %1282 = vrot.lane.b32.xlu0 %v1279, 32
          %v1283 = vpop.permute.xlu0 %1282
          %1284 = vrot.lane.b32.xlu0 %v1278, 32
          %v1285 = vpop.permute.xlu0 %1284
          %vm1286 = vcmask 261120
          %v1287 = vsel %vm1286, %v1281, %v1283
          %v1288 = vsel %vm1286, %v1283, %v1285
          %v1291 = vmul.f32 %v1261, %v1287
          %v1292 = vmul.f32 %v1261, %v1288
          %v1293 = vadd.f32 %v1254, %v1291
          %v1294 = vadd.f32 %v1255, %v1292
          %v1295 = vld [vmem:[#allocation4] sm:$0x3]
          %v1296 = vld [vmem:[#allocation2] sm:$0x3f]
          %1298 = vset.pattern.permute.xlu0 17
          %1299 = vperm.xlu0 %1298, %v1295
          %v1300 = vpop.permute.xlu0 %1299
          %v1303 = vcombine.high %v1296, %v1296
          %v1305 = vunpack.c.l.s4 1983009808
          %v1306 = vunpack.c.0.s8 %v1305
          %v1307 = vlaneseq
          %v1308 = vshrl.u32 %v1307, 7
          %v1309 = vsub.s32 %v1306, %v1308
          %v1310 = vrot.slane %v1296, %v1309
          %v1312 = vunpack.c.l.s4 1983009808
          %v1313 = vunpack.c.0.s8 %v1312
          %v1314 = vlaneseq
          %v1315 = vshrl.u32 %v1314, 7
          %v1316 = vsub.s32 %v1313, %v1315
          %v1317 = vrot.slane %v1303, %v1316
          %v1318 = vcombine.high %v1310, %v1310
          %1319 = vrot.lane.b32.xlu0 %v1310, 16
          %v1320 = vpop.permute.xlu0 %1319
          %1321 = vrot.lane.b32.xlu0 %v1318, 16
          %v1322 = vpop.permute.xlu0 %1321
          %1323 = vrot.lane.b32.xlu0 %v1317, 16
          %v1324 = vpop.permute.xlu0 %1323
          %vm1325 = vcmask 130048
          %v1326 = vsel %vm1325, %v1320, %v1322
          %v1327 = vsel %vm1325, %v1322, %v1324
          %v1330 = vmul.f32 %v1300, %v1326
          %v1331 = vmul.f32 %v1300, %v1327
          %v1332 = vadd.f32 %v1293, %v1330
          %v1333 = vadd.f32 %v1294, %v1331
          %v1334 = vld [vmem:[#allocation4] sm:$0x3]
          %v1335 = vld [vmem:[#allocation2 + $0x2] sm:$0xf]
          %1337 = vset.pattern.permute.xlu0 24
          %1338 = vperm.xlu0 %1337, %v1334
          %v1339 = vpop.permute.xlu0 %1338
          %v1343 = vunpack.c.l.s4 1983009808
          %v1344 = vunpack.c.0.s8 %v1343
          %v1345 = vlaneseq
          %v1346 = vshrl.u32 %v1345, 7
          %v1347 = vsub.s32 %v1344, %v1346
          %v1348 = vrot.slane %v1335, %v1347
          %v1349 = vcombine.high %v1348, %v1348
          %v1352 = vmul.f32 %v1339, %v1348
          %v1353 = vmul.f32 %v1339, %v1349
          %v1354 = vadd.f32 %v1332, %v1352
          %v1355 = vadd.f32 %v1333, %v1353
          %v1356 = vld [vmem:[#allocation4] sm:$0x3]
          %v1357 = vld [vmem:[#allocation2 + $0x2] sm:$0x3f]
          %1359 = vset.pattern.permute.xlu0 31
          %1360 = vperm.xlu0 %1359, %v1356
          %v1361 = vpop.permute.xlu0 %1360
          %v1364 = vcombine.high %v1357, %v1357
          %v1366 = vunpack.c.l.s4 1983009808
          %v1367 = vunpack.c.0.s8 %v1366
          %v1368 = vlaneseq
          %v1369 = vshrl.u32 %v1368, 7
          %v1370 = vsub.s32 %v1367, %v1369
          %v1371 = vrot.slane %v1357, %v1370
          %v1373 = vunpack.c.l.s4 1983009808
          %v1374 = vunpack.c.0.s8 %v1373
          %v1375 = vlaneseq
          %v1376 = vshrl.u32 %v1375, 7
          %v1377 = vsub.s32 %v1374, %v1376
          %v1378 = vrot.slane %v1364, %v1377
          %v1379 = vcombine.high %v1371, %v1371
          %1380 = vrot.lane.b32.xlu0 %v1371, 112
          %v1381 = vpop.permute.xlu0 %1380
          %1382 = vrot.lane.b32.xlu0 %v1379, 112
          %v1383 = vpop.permute.xlu0 %1382
          %1384 = vrot.lane.b32.xlu0 %v1378, 112
          %v1385 = vpop.permute.xlu0 %1384
          %vm1386 = vcmask 916480
          %v1387 = vsel %vm1386, %v1381, %v1383
          %v1388 = vsel %vm1386, %v1383, %v1385
          %v1391 = vmul.f32 %v1361, %v1387
          %v1392 = vmul.f32 %v1361, %v1388
          %v1393 = vadd.f32 %v1354, %v1391
          %v1394 = vadd.f32 %v1355, %v1392
          %v1395 = vld [vmem:[#allocation4] sm:$0x3]
          %v1396 = vld [vmem:[#allocation2 + $0x2] sm:$0x3f]
          %1398 = vset.pattern.permute.xlu0 38
          %1399 = vperm.xlu0 %1398, %v1395
          %v1400 = vpop.permute.xlu0 %1399
          %v1403 = vcombine.high %v1396, %v1396
          %v1405 = vunpack.c.l.s4 1983009808
          %v1406 = vunpack.c.0.s8 %v1405
          %v1407 = vlaneseq
          %v1408 = vshrl.u32 %v1407, 7
          %v1409 = vsub.s32 %v1406, %v1408
          %v1410 = vrot.slane %v1396, %v1409
          %v1412 = vunpack.c.l.s4 1983009808
          %v1413 = vunpack.c.0.s8 %v1412
          %v1414 = vlaneseq
          %v1415 = vshrl.u32 %v1414, 7
          %v1416 = vsub.s32 %v1413, %v1415
          %v1417 = vrot.slane %v1403, %v1416
          %v1418 = vcombine.high %v1410, %v1410
          %1419 = vrot.lane.b32.xlu0 %v1410, 96
          %v1420 = vpop.permute.xlu0 %1419
          %1421 = vrot.lane.b32.xlu0 %v1418, 96
          %v1422 = vpop.permute.xlu0 %1421
          %1423 = vrot.lane.b32.xlu0 %v1417, 96
          %v1424 = vpop.permute.xlu0 %1423
          %vm1425 = vcmask 785408
          %v1426 = vsel %vm1425, %v1420, %v1422
          %v1427 = vsel %vm1425, %v1422, %v1424
          %v1430 = vmul.f32 %v1400, %v1426
          %v1431 = vmul.f32 %v1400, %v1427
          %v1432 = vadd.f32 %v1393, %v1430
          %v1433 = vadd.f32 %v1394, %v1431
          %v1434 = vld [vmem:[#allocation4] sm:$0x3]
          %v1435 = vld [vmem:[#allocation2 + $0x2] sm:$0x3f]
          %1437 = vset.pattern.permute.xlu0 45
          %1438 = vperm.xlu0 %1437, %v1434
          %v1439 = vpop.permute.xlu0 %1438
          %v1442 = vcombine.high %v1435, %v1435
          %v1444 = vunpack.c.l.s4 1983009808
          %v1445 = vunpack.c.0.s8 %v1444
          %v1446 = vlaneseq
          %v1447 = vshrl.u32 %v1446, 7
          %v1448 = vsub.s32 %v1445, %v1447
          %v1449 = vrot.slane %v1435, %v1448
          %v1451 = vunpack.c.l.s4 1983009808
          %v1452 = vunpack.c.0.s8 %v1451
          %v1453 = vlaneseq
          %v1454 = vshrl.u32 %v1453, 7
          %v1455 = vsub.s32 %v1452, %v1454
          %v1456 = vrot.slane %v1442, %v1455
          %v1457 = vcombine.high %v1449, %v1449
          %1458 = vrot.lane.b32.xlu0 %v1449, 80
          %v1459 = vpop.permute.xlu0 %1458
          %1460 = vrot.lane.b32.xlu0 %v1457, 80
          %v1461 = vpop.permute.xlu0 %1460
          %1462 = vrot.lane.b32.xlu0 %v1456, 80
          %v1463 = vpop.permute.xlu0 %1462
          %vm1464 = vcmask 654336
          %v1465 = vsel %vm1464, %v1459, %v1461
          %v1466 = vsel %vm1464, %v1461, %v1463
          %v1469 = vmul.f32 %v1439, %v1465
          %v1470 = vmul.f32 %v1439, %v1466
          %v1471 = vadd.f32 %v1432, %v1469
          %v1472 = vadd.f32 %v1433, %v1470
          %vm1473 = vcmp.ge.s32.totalorder %v348, 0
          %vm1474 = vcmp.ge.s32.totalorder %v349, 0
          %vm1475 = vcmp.lt.s32.totalorder %v348, 16
          %vm1476 = vcmp.lt.s32.totalorder %v349, 16
          %vm1477 = vmand %vm1473, %vm1475
          %vm1478 = vmand %vm1474, %vm1476
          %v1479 = vsel %vm1477, 1, 0
          %v1480 = vsel %vm1478, 1, 0
          %vm1481 = vcmp.eq.s32.totalorder %v1479, 1
          %vm1482 = vcmp.eq.s32.totalorder %v1480, 1
          %v1483 = vsel %vm1481, %v1471, 0.0
          %v1484 = vsel %vm1482, %v1472, 0.0
          %v1485 = vadd.f32 %v1215, %v1483
          %v1486 = vadd.f32 %v1216, %v1484
          %v1487 = vld [vmem:[#allocation4] sm:$0x3]
          %v1488 = vld [vmem:[#allocation2] sm:$0x3f]
          %1490 = vset.pattern.permute.xlu0 4
          %1491 = vperm.xlu0 %1490, %v1487
          %v1492 = vpop.permute.xlu0 %1491
          %v1495 = vcombine.high %v1488, %v1488
          %v1497 = vunpack.c.l.s4 1983009808
          %v1498 = vunpack.c.0.s8 %v1497
          %v1499 = vlaneseq
          %v1500 = vshrl.u32 %v1499, 7
          %v1501 = vsub.s32 %v1498, %v1500
          %v1502 = vrot.slane %v1488, %v1501
          %v1504 = vunpack.c.l.s4 1983009808
          %v1505 = vunpack.c.0.s8 %v1504
          %v1506 = vlaneseq
          %v1507 = vshrl.u32 %v1506, 7
          %v1508 = vsub.s32 %v1505, %v1507
          %v1509 = vrot.slane %v1495, %v1508
          %v1510 = vcombine.high %v1502, %v1502
          %1511 = vrot.lane.b32.xlu0 %v1502, 47
          %v1512 = vpop.permute.xlu0 %1511
          %1513 = vrot.lane.b32.xlu0 %v1510, 47
          %v1514 = vpop.permute.xlu0 %1513
          %1515 = vrot.lane.b32.xlu0 %v1509, 47
          %v1516 = vpop.permute.xlu0 %1515
          %vm1517 = vcmask 384000
          %v1518 = vsel %vm1517, %v1512, %v1514
          %v1519 = vsel %vm1517, %v1514, %v1516
          %v1522 = vmul.f32 %v1492, %v1518
          %v1523 = vmul.f32 %v1492, %v1519
          %v1524 = vadd.f32 %v1522, 0.0
          %v1525 = vadd.f32 %v1523, 0.0
          %v1526 = vld [vmem:[#allocation4] sm:$0x3]
          %v1527 = vld [vmem:[#allocation2] sm:$0x3f]
          %1529 = vset.pattern.permute.xlu0 11
          %1530 = vperm.xlu0 %1529, %v1526
          %v1531 = vpop.permute.xlu0 %1530
          %v1534 = vcombine.high %v1527, %v1527
          %v1536 = vunpack.c.l.s4 1983009808
          %v1537 = vunpack.c.0.s8 %v1536
          %v1538 = vlaneseq
          %v1539 = vshrl.u32 %v1538, 7
          %v1540 = vsub.s32 %v1537, %v1539
          %v1541 = vrot.slane %v1527, %v1540
          %v1543 = vunpack.c.l.s4 1983009808
          %v1544 = vunpack.c.0.s8 %v1543
          %v1545 = vlaneseq
          %v1546 = vshrl.u32 %v1545, 7
          %v1547 = vsub.s32 %v1544, %v1546
          %v1548 = vrot.slane %v1534, %v1547
          %v1549 = vcombine.high %v1541, %v1541
          %1550 = vrot.lane.b32.xlu0 %v1541, 31
          %v1551 = vpop.permute.xlu0 %1550
          %1552 = vrot.lane.b32.xlu0 %v1549, 31
          %v1553 = vpop.permute.xlu0 %1552
          %1554 = vrot.lane.b32.xlu0 %v1548, 31
          %v1555 = vpop.permute.xlu0 %1554
          %vm1556 = vcmask 252928
          %v1557 = vsel %vm1556, %v1551, %v1553
          %v1558 = vsel %vm1556, %v1553, %v1555
          %v1561 = vmul.f32 %v1531, %v1557
          %v1562 = vmul.f32 %v1531, %v1558
          %v1563 = vadd.f32 %v1524, %v1561
          %v1564 = vadd.f32 %v1525, %v1562
          %v1565 = vld [vmem:[#allocation4] sm:$0x3]
          %v1566 = vld [vmem:[#allocation2] sm:$0x3f]
          %1568 = vset.pattern.permute.xlu0 18
          %1569 = vperm.xlu0 %1568, %v1565
          %v1570 = vpop.permute.xlu0 %1569
          %v1573 = vcombine.high %v1566, %v1566
          %v1575 = vunpack.c.l.s4 1983009808
          %v1576 = vunpack.c.0.s8 %v1575
          %v1577 = vlaneseq
          %v1578 = vshrl.u32 %v1577, 7
          %v1579 = vsub.s32 %v1576, %v1578
          %v1580 = vrot.slane %v1566, %v1579
          %v1582 = vunpack.c.l.s4 1983009808
          %v1583 = vunpack.c.0.s8 %v1582
          %v1584 = vlaneseq
          %v1585 = vshrl.u32 %v1584, 7
          %v1586 = vsub.s32 %v1583, %v1585
          %v1587 = vrot.slane %v1573, %v1586
          %v1588 = vcombine.high %v1580, %v1580
          %1589 = vrot.lane.b32.xlu0 %v1580, 15
          %v1590 = vpop.permute.xlu0 %1589
          %1591 = vrot.lane.b32.xlu0 %v1588, 15
          %v1592 = vpop.permute.xlu0 %1591
          %1593 = vrot.lane.b32.xlu0 %v1587, 15
          %v1594 = vpop.permute.xlu0 %1593
          %vm1595 = vcmask 121856
          %v1596 = vsel %vm1595, %v1590, %v1592
          %v1597 = vsel %vm1595, %v1592, %v1594
          %v1600 = vmul.f32 %v1570, %v1596
          %v1601 = vmul.f32 %v1570, %v1597
          %v1602 = vadd.f32 %v1563, %v1600
          %v1603 = vadd.f32 %v1564, %v1601
          %v1604 = vld [vmem:[#allocation4] sm:$0x3]
          %v1605 = vld [vmem:[#allocation2 + $0x2] sm:$0x3f]
          %1607 = vset.pattern.permute.xlu0 25
          %1608 = vperm.xlu0 %1607, %v1604
          %v1609 = vpop.permute.xlu0 %1608
          %v1612 = vcombine.high %v1605, %v1605
          %v1614 = vunpack.c.l.s4 1983009808
          %v1615 = vunpack.c.0.s8 %v1614
          %v1616 = vlaneseq
          %v1617 = vshrl.u32 %v1616, 7
          %v1618 = vsub.s32 %v1615, %v1617
          %v1619 = vrot.slane %v1605, %v1618
          %v1621 = vunpack.c.l.s4 1983009808
          %v1622 = vunpack.c.0.s8 %v1621
          %v1623 = vlaneseq
          %v1624 = vshrl.u32 %v1623, 7
          %v1625 = vsub.s32 %v1622, %v1624
          %v1626 = vrot.slane %v1612, %v1625
          %v1627 = vcombine.high %v1619, %v1619
          %1628 = vrot.lane.b32.xlu0 %v1619, 127
          %v1629 = vpop.permute.xlu0 %1628
          %1630 = vrot.lane.b32.xlu0 %v1627, 127
          %v1631 = vpop.permute.xlu0 %1630
          %1632 = vrot.lane.b32.xlu0 %v1626, 127
          %v1633 = vpop.permute.xlu0 %1632
          %vm1634 = vcmask 1039360
          %v1635 = vsel %vm1634, %v1629, %v1631
          %v1636 = vsel %vm1634, %v1631, %v1633
          %v1639 = vmul.f32 %v1609, %v1635
          %v1640 = vmul.f32 %v1609, %v1636
          %v1641 = vadd.f32 %v1602, %v1639
          %v1642 = vadd.f32 %v1603, %v1640
          %v1643 = vld [vmem:[#allocation4] sm:$0x3]
          %v1644 = vld [vmem:[#allocation2 + $0x2] sm:$0x3f]
          %1646 = vset.pattern.permute.xlu0 32
          %1647 = vperm.xlu0 %1646, %v1643
          %v1648 = vpop.permute.xlu0 %1647
          %v1651 = vcombine.high %v1644, %v1644
          %v1653 = vunpack.c.l.s4 1983009808
          %v1654 = vunpack.c.0.s8 %v1653
          %v1655 = vlaneseq
          %v1656 = vshrl.u32 %v1655, 7
          %v1657 = vsub.s32 %v1654, %v1656
          %v1658 = vrot.slane %v1644, %v1657
          %v1660 = vunpack.c.l.s4 1983009808
          %v1661 = vunpack.c.0.s8 %v1660
          %v1662 = vlaneseq
          %v1663 = vshrl.u32 %v1662, 7
          %v1664 = vsub.s32 %v1661, %v1663
          %v1665 = vrot.slane %v1651, %v1664
          %v1666 = vcombine.high %v1658, %v1658
          %1667 = vrot.lane.b32.xlu0 %v1658, 111
          %v1668 = vpop.permute.xlu0 %1667
          %1669 = vrot.lane.b32.xlu0 %v1666, 111
          %v1670 = vpop.permute.xlu0 %1669
          %1671 = vrot.lane.b32.xlu0 %v1665, 111
          %v1672 = vpop.permute.xlu0 %1671
          %vm1673 = vcmask 908288
          %v1674 = vsel %vm1673, %v1668, %v1670
          %v1675 = vsel %vm1673, %v1670, %v1672
          %v1678 = vmul.f32 %v1648, %v1674
          %v1679 = vmul.f32 %v1648, %v1675
          %v1680 = vadd.f32 %v1641, %v1678
          %v1681 = vadd.f32 %v1642, %v1679
          %v1682 = vld [vmem:[#allocation4] sm:$0x3]
          %v1683 = vld [vmem:[#allocation2 + $0x2] sm:$0x3f]
          %1685 = vset.pattern.permute.xlu0 39
          %1686 = vperm.xlu0 %1685, %v1682
          %v1687 = vpop.permute.xlu0 %1686
          %v1690 = vcombine.high %v1683, %v1683
          %v1692 = vunpack.c.l.s4 1983009808
          %v1693 = vunpack.c.0.s8 %v1692
          %v1694 = vlaneseq
          %v1695 = vshrl.u32 %v1694, 7
          %v1696 = vsub.s32 %v1693, %v1695
          %v1697 = vrot.slane %v1683, %v1696
          %v1699 = vunpack.c.l.s4 1983009808
          %v1700 = vunpack.c.0.s8 %v1699
          %v1701 = vlaneseq
          %v1702 = vshrl.u32 %v1701, 7
          %v1703 = vsub.s32 %v1700, %v1702
          %v1704 = vrot.slane %v1690, %v1703
          %v1705 = vcombine.high %v1697, %v1697
          %1706 = vrot.lane.b32.xlu0 %v1697, 95
          %v1707 = vpop.permute.xlu0 %1706
          %1708 = vrot.lane.b32.xlu0 %v1705, 95
          %v1709 = vpop.permute.xlu0 %1708
          %1710 = vrot.lane.b32.xlu0 %v1704, 95
          %v1711 = vpop.permute.xlu0 %1710
          %vm1712 = vcmask 777216
          %v1713 = vsel %vm1712, %v1707, %v1709
          %v1714 = vsel %vm1712, %v1709, %v1711
          %v1717 = vmul.f32 %v1687, %v1713
          %v1718 = vmul.f32 %v1687, %v1714
          %v1719 = vadd.f32 %v1680, %v1717
          %v1720 = vadd.f32 %v1681, %v1718
          %v1721 = vld [vmem:[#allocation4] sm:$0x3]
          %v1722 = vld [vmem:[#allocation2 + $0x2] sm:$0x3f]
          %1724 = vset.pattern.permute.xlu0 46
          %1725 = vperm.xlu0 %1724, %v1721
          %v1726 = vpop.permute.xlu0 %1725
          %v1729 = vcombine.high %v1722, %v1722
          %v1731 = vunpack.c.l.s4 1983009808
          %v1732 = vunpack.c.0.s8 %v1731
          %v1733 = vlaneseq
          %v1734 = vshrl.u32 %v1733, 7
          %v1735 = vsub.s32 %v1732, %v1734
          %v1736 = vrot.slane %v1722, %v1735
          %v1738 = vunpack.c.l.s4 1983009808
          %v1739 = vunpack.c.0.s8 %v1738
          %v1740 = vlaneseq
          %v1741 = vshrl.u32 %v1740, 7
          %v1742 = vsub.s32 %v1739, %v1741
          %v1743 = vrot.slane %v1729, %v1742
          %v1744 = vcombine.high %v1736, %v1736
          %1745 = vrot.lane.b32.xlu0 %v1736, 79
          %v1746 = vpop.permute.xlu0 %1745
          %1747 = vrot.lane.b32.xlu0 %v1744, 79
          %v1748 = vpop.permute.xlu0 %1747
          %1749 = vrot.lane.b32.xlu0 %v1743, 79
          %v1750 = vpop.permute.xlu0 %1749
          %vm1751 = vcmask 646144
          %v1752 = vsel %vm1751, %v1746, %v1748
          %v1753 = vsel %vm1751, %v1748, %v1750
          %v1756 = vmul.f32 %v1726, %v1752
          %v1757 = vmul.f32 %v1726, %v1753
          %v1758 = vadd.f32 %v1719, %v1756
          %v1759 = vadd.f32 %v1720, %v1757
          %v1760 = vadd.s32 %v348, 1
          %v1761 = vadd.s32 %v349, 1
          %vm1762 = vcmp.ge.s32.totalorder %v1760, 0
          %vm1763 = vcmp.ge.s32.totalorder %v1761, 0
          %vm1764 = vcmp.lt.s32.totalorder %v1760, 16
          %vm1765 = vcmp.lt.s32.totalorder %v1761, 16
          %vm1766 = vmand %vm1762, %vm1764
          %vm1767 = vmand %vm1763, %vm1765
          %v1768 = vsel %vm1766, 1, 0
          %v1769 = vsel %vm1767, 1, 0
          %vm1770 = vcmp.eq.s32.totalorder %v1768, 1
          %vm1771 = vcmp.eq.s32.totalorder %v1769, 1
          %v1772 = vsel %vm1770, %v1758, 0.0
          %v1773 = vsel %vm1771, %v1759, 0.0
          %v1774 = vadd.f32 %v1485, %v1772
          %v1775 = vadd.f32 %v1486, %v1773
          %v1776 = vld [vmem:[#allocation4] sm:$0x3]
          %v1777 = vld [vmem:[#allocation2] sm:$0x3f]
          %1779 = vset.pattern.permute.xlu0 5
          %1780 = vperm.xlu0 %1779, %v1776
          %v1781 = vpop.permute.xlu0 %1780
          %v1784 = vcombine.high %v1777, %v1777
          %v1786 = vunpack.c.l.s4 1983009808
          %v1787 = vunpack.c.0.s8 %v1786
          %v1788 = vlaneseq
          %v1789 = vshrl.u32 %v1788, 7
          %v1790 = vsub.s32 %v1787, %v1789
          %v1791 = vrot.slane %v1777, %v1790
          %v1793 = vunpack.c.l.s4 1983009808
          %v1794 = vunpack.c.0.s8 %v1793
          %v1795 = vlaneseq
          %v1796 = vshrl.u32 %v1795, 7
          %v1797 = vsub.s32 %v1794, %v1796
          %v1798 = vrot.slane %v1784, %v1797
          %v1799 = vcombine.high %v1791, %v1791
          %1800 = vrot.lane.b32.xlu0 %v1791, 46
          %v1801 = vpop.permute.xlu0 %1800
          %1802 = vrot.lane.b32.xlu0 %v1799, 46
          %v1803 = vpop.permute.xlu0 %1802
          %1804 = vrot.lane.b32.xlu0 %v1798, 46
          %v1805 = vpop.permute.xlu0 %1804
          %vm1806 = vcmask 375808
          %v1807 = vsel %vm1806, %v1801, %v1803
          %v1808 = vsel %vm1806, %v1803, %v1805
          %v1811 = vmul.f32 %v1781, %v1807
          %v1812 = vmul.f32 %v1781, %v1808
          %v1813 = vadd.f32 %v1811, 0.0
          %v1814 = vadd.f32 %v1812, 0.0
          %v1815 = vld [vmem:[#allocation4] sm:$0x3]
          %v1816 = vld [vmem:[#allocation2] sm:$0x3f]
          %1818 = vset.pattern.permute.xlu0 12
          %1819 = vperm.xlu0 %1818, %v1815
          %v1820 = vpop.permute.xlu0 %1819
          %v1823 = vcombine.high %v1816, %v1816
          %v1825 = vunpack.c.l.s4 1983009808
          %v1826 = vunpack.c.0.s8 %v1825
          %v1827 = vlaneseq
          %v1828 = vshrl.u32 %v1827, 7
          %v1829 = vsub.s32 %v1826, %v1828
          %v1830 = vrot.slane %v1816, %v1829
          %v1832 = vunpack.c.l.s4 1983009808
          %v1833 = vunpack.c.0.s8 %v1832
          %v1834 = vlaneseq
          %v1835 = vshrl.u32 %v1834, 7
          %v1836 = vsub.s32 %v1833, %v1835
          %v1837 = vrot.slane %v1823, %v1836
          %v1838 = vcombine.high %v1830, %v1830
          %1839 = vrot.lane.b32.xlu0 %v1830, 30
          %v1840 = vpop.permute.xlu0 %1839
          %1841 = vrot.lane.b32.xlu0 %v1838, 30
          %v1842 = vpop.permute.xlu0 %1841
          %1843 = vrot.lane.b32.xlu0 %v1837, 30
          %v1844 = vpop.permute.xlu0 %1843
          %vm1845 = vcmask 244736
          %v1846 = vsel %vm1845, %v1840, %v1842
          %v1847 = vsel %vm1845, %v1842, %v1844
          %v1850 = vmul.f32 %v1820, %v1846
          %v1851 = vmul.f32 %v1820, %v1847
          %v1852 = vadd.f32 %v1813, %v1850
          %v1853 = vadd.f32 %v1814, %v1851
          %v1854 = vld [vmem:[#allocation4] sm:$0x3]
          %v1855 = vld [vmem:[#allocation2] sm:$0x3f]
          %1857 = vset.pattern.permute.xlu0 19
          %1858 = vperm.xlu0 %1857, %v1854
          %v1859 = vpop.permute.xlu0 %1858
          %v1862 = vcombine.high %v1855, %v1855
          %v1864 = vunpack.c.l.s4 1983009808
          %v1865 = vunpack.c.0.s8 %v1864
          %v1866 = vlaneseq
          %v1867 = vshrl.u32 %v1866, 7
          %v1868 = vsub.s32 %v1865, %v1867
          %v1869 = vrot.slane %v1855, %v1868
          %v1871 = vunpack.c.l.s4 1983009808
          %v1872 = vunpack.c.0.s8 %v1871
          %v1873 = vlaneseq
          %v1874 = vshrl.u32 %v1873, 7
          %v1875 = vsub.s32 %v1872, %v1874
          %v1876 = vrot.slane %v1862, %v1875
          %v1877 = vcombine.high %v1869, %v1869
          %1878 = vrot.lane.b32.xlu0 %v1869, 14
          %v1879 = vpop.permute.xlu0 %1878
          %1880 = vrot.lane.b32.xlu0 %v1877, 14
          %v1881 = vpop.permute.xlu0 %1880
          %1882 = vrot.lane.b32.xlu0 %v1876, 14
          %v1883 = vpop.permute.xlu0 %1882
          %vm1884 = vcmask 113664
          %v1885 = vsel %vm1884, %v1879, %v1881
          %v1886 = vsel %vm1884, %v1881, %v1883
          %v1889 = vmul.f32 %v1859, %v1885
          %v1890 = vmul.f32 %v1859, %v1886
          %v1891 = vadd.f32 %v1852, %v1889
          %v1892 = vadd.f32 %v1853, %v1890
          %v1893 = vld [vmem:[#allocation4] sm:$0x3]
          %v1894 = vld [vmem:[#allocation2 + $0x2] sm:$0x3f]
          %1896 = vset.pattern.permute.xlu0 26
          %1897 = vperm.xlu0 %1896, %v1893
          %v1898 = vpop.permute.xlu0 %1897
          %v1901 = vcombine.high %v1894, %v1894
          %v1903 = vunpack.c.l.s4 1983009808
          %v1904 = vunpack.c.0.s8 %v1903
          %v1905 = vlaneseq
          %v1906 = vshrl.u32 %v1905, 7
          %v1907 = vsub.s32 %v1904, %v1906
          %v1908 = vrot.slane %v1894, %v1907
          %v1910 = vunpack.c.l.s4 1983009808
          %v1911 = vunpack.c.0.s8 %v1910
          %v1912 = vlaneseq
          %v1913 = vshrl.u32 %v1912, 7
          %v1914 = vsub.s32 %v1911, %v1913
          %v1915 = vrot.slane %v1901, %v1914
          %v1916 = vcombine.high %v1908, %v1908
          %1917 = vrot.lane.b32.xlu0 %v1908, 126
          %v1918 = vpop.permute.xlu0 %1917
          %1919 = vrot.lane.b32.xlu0 %v1916, 126
          %v1920 = vpop.permute.xlu0 %1919
          %1921 = vrot.lane.b32.xlu0 %v1915, 126
          %v1922 = vpop.permute.xlu0 %1921
          %vm1923 = vcmask 1031168
          %v1924 = vsel %vm1923, %v1918, %v1920
          %v1925 = vsel %vm1923, %v1920, %v1922
          %v1928 = vmul.f32 %v1898, %v1924
          %v1929 = vmul.f32 %v1898, %v1925
          %v1930 = vadd.f32 %v1891, %v1928
          %v1931 = vadd.f32 %v1892, %v1929
          %v1932 = vld [vmem:[#allocation4] sm:$0x3]
          %v1933 = vld [vmem:[#allocation2 + $0x2] sm:$0x3f]
          %1935 = vset.pattern.permute.xlu0 33
          %1936 = vperm.xlu0 %1935, %v1932
          %v1937 = vpop.permute.xlu0 %1936
          %v1940 = vcombine.high %v1933, %v1933
          %v1942 = vunpack.c.l.s4 1983009808
          %v1943 = vunpack.c.0.s8 %v1942
          %v1944 = vlaneseq
          %v1945 = vshrl.u32 %v1944, 7
          %v1946 = vsub.s32 %v1943, %v1945
          %v1947 = vrot.slane %v1933, %v1946
          %v1949 = vunpack.c.l.s4 1983009808
          %v1950 = vunpack.c.0.s8 %v1949
          %v1951 = vlaneseq
          %v1952 = vshrl.u32 %v1951, 7
          %v1953 = vsub.s32 %v1950, %v1952
          %v1954 = vrot.slane %v1940, %v1953
          %v1955 = vcombine.high %v1947, %v1947
          %1956 = vrot.lane.b32.xlu0 %v1947, 110
          %v1957 = vpop.permute.xlu0 %1956
          %1958 = vrot.lane.b32.xlu0 %v1955, 110
          %v1959 = vpop.permute.xlu0 %1958
          %1960 = vrot.lane.b32.xlu0 %v1954, 110
          %v1961 = vpop.permute.xlu0 %1960
          %vm1962 = vcmask 900096
          %v1963 = vsel %vm1962, %v1957, %v1959
          %v1964 = vsel %vm1962, %v1959, %v1961
          %v1967 = vmul.f32 %v1937, %v1963
          %v1968 = vmul.f32 %v1937, %v1964
          %v1969 = vadd.f32 %v1930, %v1967
          %v1970 = vadd.f32 %v1931, %v1968
          %v1971 = vld [vmem:[#allocation4] sm:$0x3]
          %v1972 = vld [vmem:[#allocation2 + $0x2] sm:$0x3f]
          %1974 = vset.pattern.permute.xlu0 40
          %1975 = vperm.xlu0 %1974, %v1971
          %v1976 = vpop.permute.xlu0 %1975
          %v1979 = vcombine.high %v1972, %v1972
          %v1981 = vunpack.c.l.s4 1983009808
          %v1982 = vunpack.c.0.s8 %v1981
          %v1983 = vlaneseq
          %v1984 = vshrl.u32 %v1983, 7
          %v1985 = vsub.s32 %v1982, %v1984
          %v1986 = vrot.slane %v1972, %v1985
          %v1988 = vunpack.c.l.s4 1983009808
          %v1989 = vunpack.c.0.s8 %v1988
          %v1990 = vlaneseq
          %v1991 = vshrl.u32 %v1990, 7
          %v1992 = vsub.s32 %v1989, %v1991
          %v1993 = vrot.slane %v1979, %v1992
          %v1994 = vcombine.high %v1986, %v1986
          %1995 = vrot.lane.b32.xlu0 %v1986, 94
          %v1996 = vpop.permute.xlu0 %1995
          %1997 = vrot.lane.b32.xlu0 %v1994, 94
          %v1998 = vpop.permute.xlu0 %1997
          %1999 = vrot.lane.b32.xlu0 %v1993, 94
          %v2000 = vpop.permute.xlu0 %1999
          %vm2001 = vcmask 769024
          %v2002 = vsel %vm2001, %v1996, %v1998
          %v2003 = vsel %vm2001, %v1998, %v2000
          %v2006 = vmul.f32 %v1976, %v2002
          %v2007 = vmul.f32 %v1976, %v2003
          %v2008 = vadd.f32 %v1969, %v2006
          %v2009 = vadd.f32 %v1970, %v2007
          %v2010 = vld [vmem:[#allocation4] sm:$0x3]
          %v2011 = vld [vmem:[#allocation2 + $0x2] sm:$0x3f]
          %2013 = vset.pattern.permute.xlu0 47
          %2014 = vperm.xlu0 %2013, %v2010
          %v2015 = vpop.permute.xlu0 %2014
          %v2018 = vcombine.high %v2011, %v2011
          %v2020 = vunpack.c.l.s4 1983009808
          %v2021 = vunpack.c.0.s8 %v2020
          %v2022 = vlaneseq
          %v2023 = vshrl.u32 %v2022, 7
          %v2024 = vsub.s32 %v2021, %v2023
          %v2025 = vrot.slane %v2011, %v2024
          %v2027 = vunpack.c.l.s4 1983009808
          %v2028 = vunpack.c.0.s8 %v2027
          %v2029 = vlaneseq
          %v2030 = vshrl.u32 %v2029, 7
          %v2031 = vsub.s32 %v2028, %v2030
          %v2032 = vrot.slane %v2018, %v2031
          %v2033 = vcombine.high %v2025, %v2025
          %2034 = vrot.lane.b32.xlu0 %v2025, 78
          %v2035 = vpop.permute.xlu0 %2034
          %2036 = vrot.lane.b32.xlu0 %v2033, 78
          %v2037 = vpop.permute.xlu0 %2036
          %2038 = vrot.lane.b32.xlu0 %v2032, 78
          %v2039 = vpop.permute.xlu0 %2038
          %vm2040 = vcmask 637952
          %v2041 = vsel %vm2040, %v2035, %v2037
          %v2042 = vsel %vm2040, %v2037, %v2039
          %v2045 = vmul.f32 %v2015, %v2041
          %v2046 = vmul.f32 %v2015, %v2042
          %v2047 = vadd.f32 %v2008, %v2045
          %v2048 = vadd.f32 %v2009, %v2046
          %v2049 = vadd.s32 %v348, 2
          %v2050 = vadd.s32 %v349, 2
          %vm2051 = vcmp.ge.s32.totalorder %v2049, 0
          %vm2052 = vcmp.ge.s32.totalorder %v2050, 0
          %vm2053 = vcmp.lt.s32.totalorder %v2049, 16
          %vm2054 = vcmp.lt.s32.totalorder %v2050, 16
          %vm2055 = vmand %vm2051, %vm2053
          %vm2056 = vmand %vm2052, %vm2054
          %v2057 = vsel %vm2055, 1, 0
          %v2058 = vsel %vm2056, 1, 0
          %vm2059 = vcmp.eq.s32.totalorder %v2057, 1
          %vm2060 = vcmp.eq.s32.totalorder %v2058, 1
          %v2061 = vsel %vm2059, %v2047, 0.0
          %v2062 = vsel %vm2060, %v2048, 0.0
          %v2063 = vadd.f32 %v1774, %v2061
          %v2064 = vadd.f32 %v1775, %v2062
          %v2065 = vld [vmem:[#allocation4] sm:$0x3]
          %v2066 = vld [vmem:[#allocation2] sm:$0x3f]
          %2068 = vset.pattern.permute.xlu0 6
          %2069 = vperm.xlu0 %2068, %v2065
          %v2070 = vpop.permute.xlu0 %2069
          %v2073 = vcombine.high %v2066, %v2066
          %v2075 = vunpack.c.l.s4 1983009808
          %v2076 = vunpack.c.0.s8 %v2075
          %v2077 = vlaneseq
          %v2078 = vshrl.u32 %v2077, 7
          %v2079 = vsub.s32 %v2076, %v2078
          %v2080 = vrot.slane %v2066, %v2079
          %v2082 = vunpack.c.l.s4 1983009808
          %v2083 = vunpack.c.0.s8 %v2082
          %v2084 = vlaneseq
          %v2085 = vshrl.u32 %v2084, 7
          %v2086 = vsub.s32 %v2083, %v2085
          %v2087 = vrot.slane %v2073, %v2086
          %v2088 = vcombine.high %v2080, %v2080
          %2089 = vrot.lane.b32.xlu0 %v2080, 45
          %v2090 = vpop.permute.xlu0 %2089
          %2091 = vrot.lane.b32.xlu0 %v2088, 45
          %v2092 = vpop.permute.xlu0 %2091
          %2093 = vrot.lane.b32.xlu0 %v2087, 45
          %v2094 = vpop.permute.xlu0 %2093
          %vm2095 = vcmask 367616
          %v2096 = vsel %vm2095, %v2090, %v2092
          %v2097 = vsel %vm2095, %v2092, %v2094
          %v2100 = vmul.f32 %v2070, %v2096
          %v2101 = vmul.f32 %v2070, %v2097
          %v2102 = vadd.f32 %v2100, 0.0
          %v2103 = vadd.f32 %v2101, 0.0
          %v2104 = vld [vmem:[#allocation4] sm:$0x3]
          %v2105 = vld [vmem:[#allocation2] sm:$0x3f]
          %2107 = vset.pattern.permute.xlu0 13
          %2108 = vperm.xlu0 %2107, %v2104
          %v2109 = vpop.permute.xlu0 %2108
          %v2112 = vcombine.high %v2105, %v2105
          %v2114 = vunpack.c.l.s4 1983009808
          %v2115 = vunpack.c.0.s8 %v2114
          %v2116 = vlaneseq
          %v2117 = vshrl.u32 %v2116, 7
          %v2118 = vsub.s32 %v2115, %v2117
          %v2119 = vrot.slane %v2105, %v2118
          %v2121 = vunpack.c.l.s4 1983009808
          %v2122 = vunpack.c.0.s8 %v2121
          %v2123 = vlaneseq
          %v2124 = vshrl.u32 %v2123, 7
          %v2125 = vsub.s32 %v2122, %v2124
          %v2126 = vrot.slane %v2112, %v2125
          %v2127 = vcombine.high %v2119, %v2119
          %2128 = vrot.lane.b32.xlu0 %v2119, 29
          %v2129 = vpop.permute.xlu0 %2128
          %2130 = vrot.lane.b32.xlu0 %v2127, 29
          %v2131 = vpop.permute.xlu0 %2130
          %2132 = vrot.lane.b32.xlu0 %v2126, 29
          %v2133 = vpop.permute.xlu0 %2132
          %vm2134 = vcmask 236544
          %v2135 = vsel %vm2134, %v2129, %v2131
          %v2136 = vsel %vm2134, %v2131, %v2133
          %v2139 = vmul.f32 %v2109, %v2135
          %v2140 = vmul.f32 %v2109, %v2136
          %v2141 = vadd.f32 %v2102, %v2139
          %v2142 = vadd.f32 %v2103, %v2140
          %v2143 = vld [vmem:[#allocation4] sm:$0x3]
          %v2144 = vld [vmem:[#allocation2] sm:$0x3f]
          %2146 = vset.pattern.permute.xlu0 20
          %2147 = vperm.xlu0 %2146, %v2143
          %v2148 = vpop.permute.xlu0 %2147
          %v2151 = vcombine.high %v2144, %v2144
          %v2153 = vunpack.c.l.s4 1983009808
          %v2154 = vunpack.c.0.s8 %v2153
          %v2155 = vlaneseq
          %v2156 = vshrl.u32 %v2155, 7
          %v2157 = vsub.s32 %v2154, %v2156
          %v2158 = vrot.slane %v2144, %v2157
          %v2160 = vunpack.c.l.s4 1983009808
          %v2161 = vunpack.c.0.s8 %v2160
          %v2162 = vlaneseq
          %v2163 = vshrl.u32 %v2162, 7
          %v2164 = vsub.s32 %v2161, %v2163
          %v2165 = vrot.slane %v2151, %v2164
          %v2166 = vcombine.high %v2158, %v2158
          %2167 = vrot.lane.b32.xlu0 %v2158, 13
          %v2168 = vpop.permute.xlu0 %2167
          %2169 = vrot.lane.b32.xlu0 %v2166, 13
          %v2170 = vpop.permute.xlu0 %2169
          %2171 = vrot.lane.b32.xlu0 %v2165, 13
          %v2172 = vpop.permute.xlu0 %2171
          %vm2173 = vcmask 105472
          %v2174 = vsel %vm2173, %v2168, %v2170
          %v2175 = vsel %vm2173, %v2170, %v2172
          %v2178 = vmul.f32 %v2148, %v2174
          %v2179 = vmul.f32 %v2148, %v2175
          %v2180 = vadd.f32 %v2141, %v2178
          %v2181 = vadd.f32 %v2142, %v2179
          %v2182 = vld [vmem:[#allocation4] sm:$0x3]
          %v2183 = vld [vmem:[#allocation2 + $0x2] sm:$0x3f]
          %2185 = vset.pattern.permute.xlu0 27
          %2186 = vperm.xlu0 %2185, %v2182
          %v2187 = vpop.permute.xlu0 %2186
          %v2190 = vcombine.high %v2183, %v2183
          %v2192 = vunpack.c.l.s4 1983009808
          %v2193 = vunpack.c.0.s8 %v2192
          %v2194 = vlaneseq
          %v2195 = vshrl.u32 %v2194, 7
          %v2196 = vsub.s32 %v2193, %v2195
          %v2197 = vrot.slane %v2183, %v2196
          %v2199 = vunpack.c.l.s4 1983009808
          %v2200 = vunpack.c.0.s8 %v2199
          %v2201 = vlaneseq
          %v2202 = vshrl.u32 %v2201, 7
          %v2203 = vsub.s32 %v2200, %v2202
          %v2204 = vrot.slane %v2190, %v2203
          %v2205 = vcombine.high %v2197, %v2197
          %2206 = vrot.lane.b32.xlu0 %v2197, 125
          %v2207 = vpop.permute.xlu0 %2206
          %2208 = vrot.lane.b32.xlu0 %v2205, 125
          %v2209 = vpop.permute.xlu0 %2208
          %2210 = vrot.lane.b32.xlu0 %v2204, 125
          %v2211 = vpop.permute.xlu0 %2210
          %vm2212 = vcmask 1022976
          %v2213 = vsel %vm2212, %v2207, %v2209
          %v2214 = vsel %vm2212, %v2209, %v2211
          %v2217 = vmul.f32 %v2187, %v2213
          %v2218 = vmul.f32 %v2187, %v2214
          %v2219 = vadd.f32 %v2180, %v2217
          %v2220 = vadd.f32 %v2181, %v2218
          %v2221 = vld [vmem:[#allocation4] sm:$0x3]
          %v2222 = vld [vmem:[#allocation2 + $0x2] sm:$0x3f]
          %2224 = vset.pattern.permute.xlu0 34
          %2225 = vperm.xlu0 %2224, %v2221
          %v2226 = vpop.permute.xlu0 %2225
          %v2229 = vcombine.high %v2222, %v2222
          %v2231 = vunpack.c.l.s4 1983009808
          %v2232 = vunpack.c.0.s8 %v2231
          %v2233 = vlaneseq
          %v2234 = vshrl.u32 %v2233, 7
          %v2235 = vsub.s32 %v2232, %v2234
          %v2236 = vrot.slane %v2222, %v2235
          %v2238 = vunpack.c.l.s4 1983009808
          %v2239 = vunpack.c.0.s8 %v2238
          %v2240 = vlaneseq
          %v2241 = vshrl.u32 %v2240, 7
          %v2242 = vsub.s32 %v2239, %v2241
          %v2243 = vrot.slane %v2229, %v2242
          %v2244 = vcombine.high %v2236, %v2236
          %2245 = vrot.lane.b32.xlu0 %v2236, 109
          %v2246 = vpop.permute.xlu0 %2245
          %2247 = vrot.lane.b32.xlu0 %v2244, 109
          %v2248 = vpop.permute.xlu0 %2247
          %2249 = vrot.lane.b32.xlu0 %v2243, 109
          %v2250 = vpop.permute.xlu0 %2249
          %vm2251 = vcmask 891904
          %v2252 = vsel %vm2251, %v2246, %v2248
          %v2253 = vsel %vm2251, %v2248, %v2250
          %v2256 = vmul.f32 %v2226, %v2252
          %v2257 = vmul.f32 %v2226, %v2253
          %v2258 = vadd.f32 %v2219, %v2256
          %v2259 = vadd.f32 %v2220, %v2257
          %v2260 = vld [vmem:[#allocation4] sm:$0x3]
          %v2261 = vld [vmem:[#allocation2 + $0x2] sm:$0x3f]
          %2263 = vset.pattern.permute.xlu0 41
          %2264 = vperm.xlu0 %2263, %v2260
          %v2265 = vpop.permute.xlu0 %2264
          %v2268 = vcombine.high %v2261, %v2261
          %v2270 = vunpack.c.l.s4 1983009808
          %v2271 = vunpack.c.0.s8 %v2270
          %v2272 = vlaneseq
          %v2273 = vshrl.u32 %v2272, 7
          %v2274 = vsub.s32 %v2271, %v2273
          %v2275 = vrot.slane %v2261, %v2274
          %v2277 = vunpack.c.l.s4 1983009808
          %v2278 = vunpack.c.0.s8 %v2277
          %v2279 = vlaneseq
          %v2280 = vshrl.u32 %v2279, 7
          %v2281 = vsub.s32 %v2278, %v2280
          %v2282 = vrot.slane %v2268, %v2281
          %v2283 = vcombine.high %v2275, %v2275
          %2284 = vrot.lane.b32.xlu0 %v2275, 93
          %v2285 = vpop.permute.xlu0 %2284
          %2286 = vrot.lane.b32.xlu0 %v2283, 93
          %v2287 = vpop.permute.xlu0 %2286
          %2288 = vrot.lane.b32.xlu0 %v2282, 93
          %v2289 = vpop.permute.xlu0 %2288
          %vm2290 = vcmask 760832
          %v2291 = vsel %vm2290, %v2285, %v2287
          %v2292 = vsel %vm2290, %v2287, %v2289
          %v2295 = vmul.f32 %v2265, %v2291
          %v2296 = vmul.f32 %v2265, %v2292
          %v2297 = vadd.f32 %v2258, %v2295
          %v2298 = vadd.f32 %v2259, %v2296
          %v2299 = vld [vmem:[#allocation4] sm:$0x3]
          %v2300 = vld [vmem:[#allocation2 + $0x2] sm:$0x3f]
          %2302 = vset.pattern.permute.xlu0 48
          %2303 = vperm.xlu0 %2302, %v2299
          %v2304 = vpop.permute.xlu0 %2303
          %v2307 = vcombine.high %v2300, %v2300
          %v2309 = vunpack.c.l.s4 1983009808
          %v2310 = vunpack.c.0.s8 %v2309
          %v2311 = vlaneseq
          %v2312 = vshrl.u32 %v2311, 7
          %v2313 = vsub.s32 %v2310, %v2312
          %v2314 = vrot.slane %v2300, %v2313
          %v2316 = vunpack.c.l.s4 1983009808
          %v2317 = vunpack.c.0.s8 %v2316
          %v2318 = vlaneseq
          %v2319 = vshrl.u32 %v2318, 7
          %v2320 = vsub.s32 %v2317, %v2319
          %v2321 = vrot.slane %v2307, %v2320
          %v2322 = vcombine.high %v2314, %v2314
          %2323 = vrot.lane.b32.xlu0 %v2314, 77
          %v2324 = vpop.permute.xlu0 %2323
          %2325 = vrot.lane.b32.xlu0 %v2322, 77
          %v2326 = vpop.permute.xlu0 %2325
          %2327 = vrot.lane.b32.xlu0 %v2321, 77
          %v2328 = vpop.permute.xlu0 %2327
          %vm2329 = vcmask 629760
          %v2330 = vsel %vm2329, %v2324, %v2326
          %v2331 = vsel %vm2329, %v2326, %v2328
          %v2334 = vmul.f32 %v2304, %v2330
          %v2335 = vmul.f32 %v2304, %v2331
          %v2336 = vadd.f32 %v2297, %v2334
          %v2337 = vadd.f32 %v2298, %v2335
          %v2338 = vadd.s32 %v348, 3
          %v2339 = vadd.s32 %v349, 3
          %vm2340 = vcmp.ge.s32.totalorder %v2338, 0
          %vm2341 = vcmp.ge.s32.totalorder %v2339, 0
          %vm2342 = vcmp.lt.s32.totalorder %v2338, 16
          %vm2343 = vcmp.lt.s32.totalorder %v2339, 16
          %vm2344 = vmand %vm2340, %vm2342
          %vm2345 = vmand %vm2341, %vm2343
          %v2346 = vsel %vm2344, 1, 0
          %v2347 = vsel %vm2345, 1, 0
          %vm2348 = vcmp.eq.s32.totalorder %v2346, 1
          %vm2349 = vcmp.eq.s32.totalorder %v2347, 1
          %v2350 = vsel %vm2348, %v2336, 0.0
          %v2351 = vsel %vm2349, %v2337, 0.0
          %v2352 = vadd.f32 %v2063, %v2350
          %v2353 = vadd.f32 %v2064, %v2351
          %vm2354 = vcmask 1041408
          %v2355 = vsel %vm2354, %v2352, 0.0
          %v2356 = vrot.slane %v2355, 4
          %v2357 = vadd.f32 %v2355, %v2356
          %v2358 = vrot.slane %v2357, 2
          %v2359 = vadd.f32 %v2357, %v2358
          %v2360 = vrot.slane %v2359, 1
          %v2361 = vadd.f32 %v2359, %v2360
          %v2362 = vsel %vm2354, %v2353, 0.0
          %v2363 = vrot.slane %v2362, 4
          %v2364 = vadd.f32 %v2362, %v2363
          %v2365 = vrot.slane %v2364, 2
          %v2366 = vadd.f32 %v2364, %v2365
          %v2367 = vrot.slane %v2366, 1
          %v2368 = vadd.f32 %v2366, %v2367
          %s2369 = sld [smem:[#allocation8]]
          %v2370 = vstv %s2369
          %v2371 = vmul.f32 %v2361, %v2370
          %v2372 = vmul.f32 %v2368, %v2370
          %s2373 = sld [smem:[#allocation8 + $0x1]]
          %v2374 = vstv %s2373
          %v2375 = vadd.f32 %v2371, %v2374
          %v2376 = vadd.f32 %v2372, %v2374
          %v2377 = vsub.f32 0.0, %v2375
          %v2378 = vsub.f32 0.0, %v2376
          %v2379 = vmul.f32 %v2377, 1.442695
          %v2380 = vpow.pop %v2379
          %v2381 = vmul.f32 %v2378, 1.442695
          %v2382 = vpow.pop %v2381
          %v2383 = vadd.f32 %v2380, 1.0
          %v2384 = vadd.f32 %v2382, 1.0
          %v2385 = vrcp.pop %v2383
          %v2386 = vrcp.pop %v2384
          %v2389 = vcombine.low %v2385, %v2386
          %v2391 = vunpack.c.l.s4 1966171168
          %v2392 = vunpack.c.0.s8 %v2391
          %v2393 = vlaneseq
          %v2394 = vshrl.u32 %v2393, 7
          %v2395 = vsub.s32 %v2392, %v2394
          %v2396 = vrot.slane %v2389, %v2395
          %v2398 = vunpack.c.l.s4 1966171168
          %v2399 = vunpack.c.0.s8 %v2398
          %v2400 = vlaneseq
          %v2401 = vshrl.u32 %v2400, 7
          %v2402 = vsub.s32 %v2399, %v2401
          %v2403 = vrot.slane %v2396, %v2402
          %2405 = vst.msk [vmem:[#allocation3] sm:$0x3] %vm300, %v2403
        $region48: #{tpu_custom_call.1} parent=31 // pred_fallthru
          _
        %s2406 = sadd.s32 %s28, %s29
        %s2407 = smul.u32 %s2406, 4
        %s2408 = sshra.s32 %s2407, 2
        %s2409 = sand.u32 %s2407, 3
        %s2410 = smul.u32 %s2408, 2
        %s2411 = smul.addr %s2410, 4
        %s2412 = scalar_lea.vmem %s213, %s2411 [#allocation9]
        %v2413 = vld [vmem:[%s2412] sm:$0xff]
        %v2414 = vld [vmem:[#allocation3] sm:$0x3]
        %v2416 = vlaneseq
        %v2417 = vshrl.u32 %v2416, 7
        %v2418 = vsub.s32 0, %v2417
        %v2419 = vrot.slane %v2414, %v2418
        %v2420 = vlaneseq
        %v2421 = vshrl.u32 %v2420, 7
        %v2422 = vsub.s32 1, %v2421
        %v2423 = vrot.slane %v2414, %v2422
        %v2424 = vcombine.low %v2419, %v2423
        %v2426 = vmul.f32 %v2413, %v2424
        %2427 = vst [vmem:[%s236] sm:$0xff] %v2426
        %s2428 = sand.u32 %s121, 1
        %s2429 = scalar_lea.sflag [#allocation6], %s2428
        %s2430 = sand.u32 %s121, 1
        %s2431 = smul.addr %s2430, 8
        %s2432 = scalar_lea.vmem [#allocation11], %s2431
        // Predicated region
        $region49: #{tpu_custom_call.1} parent=31 // pred_check
          %p2433 = pneg %p131
        $region50: #{tpu_custom_call.1} parent=31 // pred_check_branch
          %2435 = sbr.rel (%p2433) target = $region52
        $region51: #{tpu_custom_call.1} parent=31 // pred_region
          %s2436 = sadd.s32 %s28, %s29
          %s2438 = ssub.s32 128, 128
          %2439 = vsyncadd %s2429, %s2438
          %s2440 = smul.addr %s2436, 2
          %s2441 = smul.addr %s27, 2
          %s2442 = sadd.s32 %s2440, %s2441
          %s2443 = smul.addr %s2442, 64
          %s2444 = scalar_lea.hbm %s3, %s2443
          %s2446 = sshll.u32 %s2432, 4
          %s2447 = int_to_ptr.vmem [resolvable:$true] %s2446
          %2449 = dma.vmem_to_hbm [thread:$0]  %s2447, 128, %s2444, %s2429
        $region52: #{tpu_custom_call.1} parent=31 // pred_fallthru
          _
      $region32: #{tpu_custom_call.1} parent=5 // pred_fallthru
        _
      %p2450 = scmp.le.s32.totalorder 2, %s17
      // Predicated region
      $region53: #{tpu_custom_call.1} parent=5 // pred_check
        %p2451 = pneg %p2450
      $region54: #{tpu_custom_call.1} parent=5 // pred_check_branch
        %2453 = sbr.rel (%p2451) target = $region56
      $region55: #{tpu_custom_call.1} parent=5 // pred_region
        %s2454 = ssub.s32 %s17, 2
        // Predicated region
        $region57: #{tpu_custom_call.1} parent=55 // pred_check
          %p2455 = pneg %p137
        $region58: #{tpu_custom_call.1} parent=55 // pred_check_branch
          %2457 = sbr.rel (%p2455) target = $region60
        $region59: #{tpu_custom_call.1} parent=55 // pred_region
          %s2458 = sand.u32 %s122, 1
          %s2459 = scalar_lea.sflag [#allocation6], %s2458
          %s2460 = sand.u32 %s122, 1
          %s2461 = smul.addr %s2460, 8
          %s2462 = scalar_lea.vmem [#allocation11], %s2461
          %2463 = dma.done %s2459, 128
        $region60: #{tpu_custom_call.1} parent=55 // pred_fallthru
          _
      $region56: #{tpu_custom_call.1} parent=5 // pred_fallthru
        _
    $region6: #{tpu_custom_call.1} parent=1 // loop_footer
      %s21 = sadd.s32 1, %s17
    $region7: #{tpu_custom_call.1} parent=1 // loop_footer_branch
      %16 = sbr.rel target = $region3
    $region8: #{tpu_custom_call.1} parent=1 // loop_exit
      _
    %2464 = vsyncpa [#allocation5], 1
    %s2465 = scalar_lea.sflag [#allocation5], 1
    %2466 = vsyncpa %s2465, 1
    %2467 = vsyncpa [#allocation10], 1
    %s2468 = scalar_lea.sflag [#allocation10], 1
    %2469 = vsyncpa %s2468, 1
    %2470 = vsyncpa [#allocation6], 1
    %s2471 = scalar_lea.sflag [#allocation6], 1
    %2472 = vsyncpa %s2471, 1
    %2473 = vsyncpa [#allocation7], 1
    %s2474 = scalar_lea.sflag [#allocation7], 1
    %2475 = vsyncpa %s2474, 1

</llo_original>
